<compile_context>
chip_gen: v6e
topology: v6e:2x2x1
jax: 0.10.0
libtpu: 0.0.40
codegen_flags: <defaults>
</compile_context>

<pallas_src>
import math
from functools import partial

import numpy as np
import jax
import jax.numpy as jnp
from jax.experimental import pallas as pl
from jax.experimental.pallas import tpu as pltpu


# ----------------------------------------------------------------------------
# Deterministic synthetic parameters / constants
# ----------------------------------------------------------------------------
def generate_tms(bm_dim):
    """Deterministic T, M, S with the shapes implied by the torch broadcasting.

    T: (d, d, levy)   -- used via tensordot(bm, T, dims=1)
    M: (nf, 1, levy)  -- used via M * B.view(1, bsz, levy)
    S: (nf, d)        -- used via S * h.view(bsz, 1, d)
    """
    d = bm_dim
    nf = 2 ** d
    levy = d * (d - 1) // 2
    pairs = [(i, j) for i in range(d) for j in range(i + 1, d)]

    n_idx = np.arange(nf)
    S = np.stack(
        [np.where((n_idx >> k) & 1, -1.0, 1.0) for k in range(d)], axis=1
    ).astype(np.float32)                                   # (nf, d)

    M = np.zeros((nf, 1, levy), np.float32)
    T = np.zeros((d, d, levy), np.float32)
    for p, (i, j) in enumerate(pairs):
        M[:, 0, p] = S[:, i] * S[:, j]
        T[i, j, p] = 0.5
        T[j, i, p] = -0.5
    return T, M, S


def init_netG_params(key, in_dim, hidden, out_dim):
    """3-layer MLP, deterministic init."""
    k1, k2, k3 = jax.random.split(key, 3)

    def lin(k, fi, fo):
        return (jax.random.normal(k, (fi, fo), jnp.float32) / math.sqrt(fi),
                jnp.zeros((1, fo), jnp.float32))

    w1, b1 = lin(k1, in_dim, hidden)
    w2, b2 = lin(k2, hidden, hidden)
    w3, b3 = lin(k3, hidden, out_dim)
    return dict(w1=w1, b1=b1, w2=w2, b2=b2, w3=w3, b3=b3)


# ----------------------------------------------------------------------------
# One-time host-side constant repacking into a single VMEM slab
# ----------------------------------------------------------------------------
def build_constants(T, M, S, netG_params, *, noise_size, hidden):
    """Pack all kernel constants into ONE padded f32 slab.

    Column layout:   [ G_full (Nout) | W_A (hidden+levy*d) | W2 (hidden) ]
      G_full rows 0..Kf-1, bias row at row Kf
      W_A   rows 0..K1-1         (blockdiag(W1 + b1-via-ones-lane, T_flat))
      W2    rows 0..hidden-1, b2 at row `hidden`
    """
    d = T.shape[0]
    nf = S.shape[0]
    levy = T.shape[2]
    ld = levy * d
    K1 = noise_size + 2 * d + 1                 # [noise | h | bm | 1]
    NA = hidden + ld
    Kf = ld + hidden + d                        # [c | a2 | bm]
    Nout = nf * (d + levy)

    W1 = np.asarray(netG_params['w1'], np.float32)
    b1 = np.asarray(netG_params['b1'], np.float32)[0]
    W2 = np.asarray(netG_params['w2'], np.float32)
    b2 = np.asarray(netG_params['b2'], np.float32)[0]
    W3 = np.asarray(netG_params['w3'], np.float32)
    b3 = np.asarray(netG_params['b3'], np.float32)[0]
    T_ = np.asarray(T, np.float32)
    M_ = np.asarray(M, np.float32)[:, 0, :]     # (nf, levy)
    S_ = np.asarray(S, np.float32)              # (nf, d)

    # ---- W_A = blockdiag(W1 (+ b1 on the ones lane), T_flat) : (K1, NA)
    WA = np.zeros((K1, NA), np.float32)
    WA[:noise_size + d, :hidden] = W1
    WA[noise_size + 2 * d, :hidden] = b1
    T_flat = np.transpose(T_, (0, 2, 1)).reshape(d, ld)      # T_flat[i, p*d+k] = T[i,k,p]
    WA[noise_size + d:noise_size + 2 * d, hidden:] = T_flat

    # ---- G_full : (Kf, Nout).  Output layout per flip n: [bm (d) | levy (levy)]
    G = np.zeros((Kf, Nout), np.float32)
    bias = np.zeros((Nout,), np.float32)
    for n in range(nf):
        base = n * (d + levy)
        for k in range(d):                                   # repeat_interleave(bm) block
            G[ld + hidden + k, base + k] = 1.0
        for q in range(levy):
            col = base + d + q
            for k in range(d):                               # BMTH block (acts on c)
                G[q * d + k, col] = S_[n, k]
            G[ld:ld + hidden, col] = W3[:, q] * M_[n, q]     # M * (a2 @ W3) block
            bias[col] = b3[q] * M_[n, q]                     # M * b3
    # bm columns get 0 bias / 0 from the other blocks -> exact.

    rows = max(K1, hidden + 1, Kf + 1)
    rows_pad = -(-rows // 8) * 8
    cols = Nout + NA + hidden
    cols_pad = -(-cols // 128) * 128
    slab = np.zeros((rows_pad, cols_pad), np.float32)
    slab[:Kf, :Nout] = G
    slab[Kf, :Nout] = bias
    slab[:K1, Nout:Nout + NA] = WA
    slab[:hidden, Nout + NA:Nout + NA + hidden] = W2
    slab[hidden, Nout + NA:Nout + NA + hidden] = b2
    return jnp.asarray(slab)


# ----------------------------------------------------------------------------
# Pallas kernel: 3 MXU pushes, 2 input refs, fully fused output
# ----------------------------------------------------------------------------
def _generator_kernel(row_ref, const_ref, out_ref, *, ns, d, hidden, levy, nf):
    ld = levy * d
    NA = hidden + ld
    Kf = ld + hidden + d
    Nout = nf * (d + levy)
    colA = Nout
    colW2 = Nout + NA

    u = row_ref[...]                                        # (TB, ns+2d+1) = [noise|h|bm|1]

    # ---- MXU push 1: fused netG layer-1 (b1 via ones lane) + bm @ T_flat
    WA = const_ref[0:ns + 2 * d + 1, colA:colA + NA]
    pre1 = jnp.dot(u, WA, preferred_element_type=jnp.float32)   # (TB, hidden + levy*d)
    a1 = pre1[:, :hidden]
    a1 = jnp.where(a1 > 0, a1, 0.2 * a1)                    # LeakyReLU(0.2)
    bmt = pre1[:, hidden:]                                   # BMT, p-major: (TB, levy*d)

    # ---- MXU push 2: netG layer 2
    W2 = const_ref[0:hidden, colW2:colW2 + hidden]
    b2 = const_ref[hidden:hidden + 1, colW2:colW2 + hidden]
    a2 = jnp.dot(a1, W2, preferred_element_type=jnp.float32) + b2
    a2 = jnp.where(a2 > 0, a2, 0.2 * a2)

    # ---- c = BMT * tiled(h)   (VPU lane work only; no MXU, no broadcast constant)
    h = u[:, ns:ns + d]
    c = bmt * jnp.concatenate([h] * levy, axis=1)            # (TB, levy*d)

    # ---- MXU push 3: BMTH + M*(a2@W3 + b3) + repeat_interleave(bm), all in one dot
    bm = u[:, ns + d:ns + 2 * d]
    cab = jnp.concatenate([c, a2, bm], axis=1)               # (TB, Kf)
    G = const_ref[0:Kf, 0:Nout]
    bias = const_ref[Kf:Kf + 1, 0:Nout]
    out_ref[...] = jnp.dot(cab, G, preferred_element_type=jnp.float32) + bias


def _pick_tile_b(bsz):
    """Single grid step on single-TC chips (v5e/v6e); even 2-way split on v7x."""
    try:
        kind = jax.devices()[0].device_kind.lower()
    except Exception:
        kind = ""
    two_core = ("v7" in kind) or ("7x" in kind)
    tile = bsz
    if two_core and bsz % 16 == 0:
        tile = bsz // 2
    while tile > 1024 and tile % 16 == 0:                    # cap VMEM for huge batches
        tile //= 2
    return tile


def generator_forward(bm, noise, h, const_slab, *, noise_size, bm_dim, hidden,
                      tile_b=None):
    """Bridge-flipping forward pass.  Returns (bsz * 2**d, d + levy)."""
    bsz = bm.shape[0]
    d = bm_dim
    nf = 2 ** d
    levy = d * (d - 1) // 2
    Nout = nf * (d + levy)
    K1 = noise_size + 2 * d + 1

    if tile_b is None:
        tile_b = _pick_tile_b(bsz)
    grid = (bsz // tile_b,)

    # One packed per-row input stream (ones lane folds b1 into the first dot).
    rows = jnp.concatenate(
        [noise, h, bm, jnp.ones((bsz, 1), jnp.float32)], axis=1)      # (bsz, K1)

    out = pl.pallas_call(
        partial(_generator_kernel, ns=noise_size, d=d, hidden=hidden,
                levy=levy, nf=nf),
        out_shape=jax.ShapeDtypeStruct((bsz, Nout), jnp.float32),
        grid=grid,
        in_specs=[pl.BlockSpec((tile_b, K1), lambda i: (i, 0)),
                  pl.BlockSpec(const_slab.shape, lambda i: (0, 0))],
        out_specs=pl.BlockSpec((tile_b, Nout), lambda i: (i, 0)),
        compiler_params=pltpu.CompilerParams(
            dimension_semantics=("parallel",)),
    )(rows, const_slab)

    # (bsz, nf*(d+levy)) -> (bsz*nf, d+levy): free row-major view, no extra HBM pass.
    return out.reshape(bsz * nf, d + levy)


# ----------------------------------------------------------------------------
# Pure-JAX reference (mirrors the torch code 1:1) for a correctness check
# ----------------------------------------------------------------------------
def reference_forward(bm, noise, h, netG_params, T, M, S):
    bsz, d = bm.shape
    nf = 2 ** d
    levy = d * (d - 1) // 2
    Tj, Mj, Sj = jnp.asarray(T), jnp.asarray(M), jnp.asarray(S)

    def lrelu(x):
        return jnp.where(x > 0, x, 0.2 * x)

    x = jnp.concatenate([noise, h], axis=1)
    a1 = lrelu(x @ netG_params['w1'] + netG_params['b1'])
    a2 = lrelu(a1 @ netG_params['w2'] + netG_params['b2'])
    b_out = a2 @ netG_params['w3'] + netG_params['b3']           # (bsz, levy)

    H = Sj[None, :, :] * h[:, None, :]                           # (bsz, nf, d)
    BMT = jnp.tensordot(bm, Tj, axes=1)                          # (bsz, d, levy)
    BMTH = jnp.einsum('bnk,bkp->bnp', H, BMT).reshape(bsz * nf, levy)
    MB = (Mj * b_out[None, :, :]).transpose(1, 0, 2).reshape(bsz * nf, levy)
    levy_out = BMTH + MB
    bm_rep = jnp.repeat(bm, nf, axis=0)
    return jnp.concatenate([bm_rep, levy_out], axis=1)


# ----------------------------------------------------------------------------
if __name__ == "__main__":
    config = dict(noise_size=8, bm_dim=4, do_bridge_flipping=True)
    bm_dim = config['bm_dim']
    noise_size = config['noise_size']
    hidden = 32
    levy_dim = bm_dim * (bm_dim - 1) // 2
    bsz = 256

    key = jax.random.PRNGKey(0)
    k_bm, k_noise, k_h, k_net = jax.random.split(key, 4)

    bm = jax.random.normal(k_bm, (bsz, bm_dim), jnp.float32)
    # forward() draws these internally in torch; drawn here deterministically.
    noise = jax.random.normal(k_noise, (bsz, noise_size), jnp.float32)
    h = math.sqrt(1.0 / 12.0) * jax.random.normal(k_h, (bsz, bm_dim), jnp.float32)

    netG_params = init_netG_params(k_net, noise_size + bm_dim, hidden, levy_dim)
    T, M, S = generate_tms(bm_dim)
    const_slab = build_constants(T, M, S, netG_params,
                                 noise_size=noise_size, hidden=hidden)

    fwd = jax.jit(partial(generator_forward, noise_size=noise_size,
                          bm_dim=bm_dim, hidden=hidden))
    out = jax.block_until_ready(fwd(bm, noise, h, const_slab))

    ref = reference_forward(bm, noise, h, netG_params, T, M, S)
    assert out.shape == (bsz * 2 ** bm_dim, bm_dim + levy_dim), out.shape
    np.testing.assert_allclose(np.asarray(out), np.asarray(ref), rtol=1e-5, atol=1e-5)

    print("KERNEL_OK")
</pallas_src>

<mosaic_0001>
module attributes {stable_mosaic.version = 11 : i64} {
  func.func @_generator_kernel(%arg0: i32, %arg1: memref<256x17xf32, #tpu.memory_space<vmem>>, %arg2: memref<64x256xf32, #tpu.memory_space<vmem>>, %arg3: memref<256x160xf32, #tpu.memory_space<vmem>>) attributes {dimension_semantics = [#tpu.dimension_semantics<parallel>], iteration_bounds = array<i64: 1>, scalar_prefetch = 0 : i64, scratch_operands = 0 : i64, tpu.core_type = #tpu.core_type<tc>, window_params = [{transform_indices = @transform_0, window_bounds = array<i64: 256, 17>}, {pipeline_mode = #tpu.pipeline_mode<synchronous>, transform_indices = @transform_1, window_bounds = array<i64: 64, 256>}, {transform_indices = @transform_2, window_bounds = array<i64: 256, 160>}]} {
    %c0 = arith.constant 0 : index
    %c0_0 = arith.constant 0 : index
    %0 = vector.load %arg1[%c0, %c0_0] : memref<256x17xf32, #tpu.memory_space<vmem>>, vector<256x17xf32>
    %c0_1 = arith.constant 0 : index
    %c160 = arith.constant 160 : index
    %1 = vector.load %arg2[%c0_1, %c160] : memref<64x256xf32, #tpu.memory_space<vmem>>, vector<17x56xf32>
    %cst = arith.constant dense<0.000000e+00> : vector<256x56xf32>
    %2 = tpu.matmul %0, %1, %cst {dimension_numbers = #tpu.dot_dimension_numbers<[1], [0], [0], [1], [0, 0, 1, 1], [], []>} : vector<256x17xf32>, vector<17x56xf32>, vector<256x56xf32> -> vector<256x56xf32>
    %3 = vector.extract_strided_slice %2 {offsets = [0, 0], sizes = [256, 32], strides = [1, 1]} : vector<256x56xf32> to vector<256x32xf32>
    %cst_2 = arith.constant 0.000000e+00 : f32
    %4 = vector.broadcast %cst_2 : f32 to vector<256x32xf32>
    %5 = arith.cmpf ogt, %3, %4 : vector<256x32xf32>
    %cst_3 = arith.constant 2.000000e-01 : f32
    %6 = vector.broadcast %cst_3 : f32 to vector<256x32xf32>
    %7 = arith.mulf %6, %3 : vector<256x32xf32>
    %8 = arith.select %5, %3, %7 : vector<256x32xi1>, vector<256x32xf32>
    %9 = vector.extract_strided_slice %2 {offsets = [0, 32], sizes = [256, 24], strides = [1, 1]} : vector<256x56xf32> to vector<256x24xf32>
    %c0_4 = arith.constant 0 : index
    %c216 = arith.constant 216 : index
    %10 = vector.load %arg2[%c0_4, %c216] : memref<64x256xf32, #tpu.memory_space<vmem>>, vector<32x32xf32>
    %c32 = arith.constant 32 : index
    %c216_5 = arith.constant 216 : index
    %11 = vector.load %arg2[%c32, %c216_5] : memref<64x256xf32, #tpu.memory_space<vmem>>, vector<1x32xf32>
    %cst_6 = arith.constant dense<0.000000e+00> : vector<256x32xf32>
    %12 = tpu.matmul %8, %10, %cst_6 {dimension_numbers = #tpu.dot_dimension_numbers<[1], [0], [0], [1], [0, 0, 1, 1], [], []>} : vector<256x32xf32>, vector<32x32xf32>, vector<256x32xf32> -> vector<256x32xf32>
    %13 = vector.broadcast %11 : vector<1x32xf32> to vector<256x32xf32>
    %14 = arith.addf %12, %13 : vector<256x32xf32>
    %cst_7 = arith.constant 0.000000e+00 : f32
    %15 = vector.broadcast %cst_7 : f32 to vector<256x32xf32>
    %16 = arith.cmpf ogt, %14, %15 : vector<256x32xf32>
    %cst_8 = arith.constant 2.000000e-01 : f32
    %17 = vector.broadcast %cst_8 : f32 to vector<256x32xf32>
    %18 = arith.mulf %17, %14 : vector<256x32xf32>
    %19 = arith.select %16, %14, %18 : vector<256x32xi1>, vector<256x32xf32>
    %20 = vector.extract_strided_slice %0 {offsets = [0, 8], sizes = [256, 4], strides = [1, 1]} : vector<256x17xf32> to vector<256x4xf32>
    %21 = tpu.concatenate %20, %20, %20, %20, %20, %20 in 1 : vector<256x4xf32>, vector<256x4xf32>, vector<256x4xf32>, vector<256x4xf32>, vector<256x4xf32>, vector<256x4xf32> -> vector<256x24xf32>
    %22 = arith.mulf %9, %21 : vector<256x24xf32>
    %23 = vector.extract_strided_slice %0 {offsets = [0, 12], sizes = [256, 4], strides = [1, 1]} : vector<256x17xf32> to vector<256x4xf32>
    %24 = tpu.concatenate %22, %19, %23 in 1 : vector<256x24xf32>, vector<256x32xf32>, vector<256x4xf32> -> vector<256x60xf32>
    %c0_9 = arith.constant 0 : index
    %c0_10 = arith.constant 0 : index
    %25 = vector.load %arg2[%c0_9, %c0_10] : memref<64x256xf32, #tpu.memory_space<vmem>>, vector<60x160xf32>
    %c60 = arith.constant 60 : index
    %c0_11 = arith.constant 0 : index
    %26 = vector.load %arg2[%c60, %c0_11] : memref<64x256xf32, #tpu.memory_space<vmem>>, vector<1x160xf32>
    %cst_12 = arith.constant dense<0.000000e+00> : vector<256x160xf32>
    %27 = tpu.matmul %24, %25, %cst_12 {dimension_numbers = #tpu.dot_dimension_numbers<[1], [0], [0], [1], [0, 0, 1, 1], [], []>} : vector<256x60xf32>, vector<60x160xf32>, vector<256x160xf32> -> vector<256x160xf32>
    %28 = vector.broadcast %26 : vector<1x160xf32> to vector<256x160xf32>
    %29 = arith.addf %27, %28 : vector<256x160xf32>
    %c0_13 = arith.constant 0 : index
    %c0_14 = arith.constant 0 : index
    %30 = vector.load %arg3[%c0_13, %c0_14] : memref<256x160xf32, #tpu.memory_space<vmem>>, vector<256x160xf32>
    tpu.vector_store %arg3[%c0_13, %c0_14], %29 {strides = array<i32>} : memref<256x160xf32, #tpu.memory_space<vmem>>, vector<256x160xf32>,
    return
  }
  func.func @transform_0(%arg0: i32) -> (i32, i32) {
    %c0_i32 = arith.constant 0 : i32
    %c0_i32_0 = arith.constant 0 : i32
    return %arg0, %c0_i32 : i32, i32
  }
  func.func @transform_1(%arg0: i32) -> (i32, i32) {
    %c0_i32 = arith.constant 0 : i32
    %c0_i32_0 = arith.constant 0 : i32
    %c0_i32_1 = arith.constant 0 : i32
    return %c0_i32, %c0_i32_0 : i32, i32
  }
  func.func @transform_2(%arg0: i32) -> (i32, i32) {
    %c0_i32 = arith.constant 0 : i32
    %c0_i32_0 = arith.constant 0 : i32
    return %arg0, %c0_i32 : i32, i32
  }
}

</mosaic_0001>

<llo_original>
// kernel: generator_forward.1
$region0: #{generator_forward.1}
  #allocation0 [shape = 'u32[]', space=smem, size = 0x4, offset = 0x4, fixed_abs, tag = 'smem constant byte address 0x4 - core index']
  #allocation1 [shape = 'u32[144,128]{1,0:T(1,128)}', space=vmem, size = 0x12000, scoped, tag = 'internal scratch']
  %s0 = inlined_call_operand.vmem [shape: f32[256,17], index: 0, kind: input, shape index: {}]
  %s1 = inlined_call_operand.hbm [shape: f32[64,256], index: 1, kind: input, shape index: {}]
  %s2 = inlined_call_operand.vmem [shape: f32[256,160], index: 2, kind: output, shape index: {}]
  %s3 = sld [smem:[#allocation0]]
  $region22: #{generator_forward.1} parent=0
    _
  %s5 = ssub.s32 1, %s3
  %s6 = scalar_select 0, %s5, %s3
  $region1: #{generator_forward.1} parent=0
    #allocation2 [shape = 'u8[65536]{0}', space=vmem, size = 0x10000, scoped, tag = 'input window, operand 1, single buffered']
    #allocation3 [shape = 's32[1]{0}', space=sflag, size = 0x4, scoped, tag = 'scoped memory for generator_forward.1']
    %7 = vsyncpa [#allocation3], 0
    // Predicated region
    $region2: #{generator_forward.1} parent=1 // pred_check
      _
    $region3: #{generator_forward.1} parent=1 // pred_check_branch
      %9 = sbr.rel (0) target = $region5
    $region4: #{generator_forward.1} parent=1 // pred_region
      _
    $region5: #{generator_forward.1} parent=1 // pred_fallthru
      _
    // Predicated region
    $region6: #{generator_forward.1} parent=1 // pred_check
      _
    $region7: #{generator_forward.1} parent=1 // pred_check_branch
      %11 = sbr.rel (0) target = $region9
    $region8: #{generator_forward.1} parent=1 // pred_region
      %s13 = ssub.s32 2048, 2048
      %14 = vsyncadd [#allocation3], %s13
      %s15 = sshll.u32 [#allocation2], 4
      %s16 = int_to_ptr.vmem [resolvable:$true] %s15
      %21 = dma.hbm_to_vmem [thread:$0]  %s1, 2048, %s16, [#allocation3], 256, 256, 16
    $region9: #{generator_forward.1} parent=1 // pred_fallthru
      _
    // Predicated region
    $region10: #{generator_forward.1} parent=1 // pred_check
      _
    $region11: #{generator_forward.1} parent=1 // pred_check_branch
      %23 = sbr.rel (0) target = $region13
    $region12: #{generator_forward.1} parent=1 // pred_region
      %24 = dma.done [#allocation3], 2048
    $region13: #{generator_forward.1} parent=1 // pred_fallthru
      _
    %v25 = vld [vmem:[%s0] sm:$0xff]
    %v26 = vld [vmem:[%s0 + $0x8] sm:$0xff]
    %v27 = vld [vmem:[%s0 + $0x10] sm:$0xff]
    %v28 = vld [vmem:[%s0 + $0x18] sm:$0xff]
    %v29 = vld [vmem:[%s0 + $0x20] sm:$0xff]
    %v30 = vld [vmem:[%s0 + $0x28] sm:$0xff]
    %v31 = vld [vmem:[%s0 + $0x30] sm:$0xff]
    %v32 = vld [vmem:[%s0 + $0x38] sm:$0xff]
    %v33 = vld [vmem:[%s0 + $0x40] sm:$0xff]
    %v34 = vld [vmem:[%s0 + $0x48] sm:$0xff]
    %v35 = vld [vmem:[%s0 + $0x50] sm:$0xff]
    %v36 = vld [vmem:[%s0 + $0x58] sm:$0xff]
    %v37 = vld [vmem:[%s0 + $0x60] sm:$0xff]
    %v38 = vld [vmem:[%s0 + $0x68] sm:$0xff]
    %v39 = vld [vmem:[%s0 + $0x70] sm:$0xff]
    %v40 = vld [vmem:[%s0 + $0x78] sm:$0xff]
    %v41 = vld [vmem:[%s0 + $0x80] sm:$0xff]
    %v42 = vld [vmem:[%s0 + $0x88] sm:$0xff]
    %v43 = vld [vmem:[%s0 + $0x90] sm:$0xff]
    %v44 = vld [vmem:[%s0 + $0x98] sm:$0xff]
    %v45 = vld [vmem:[%s0 + $0xa0] sm:$0xff]
    %v46 = vld [vmem:[%s0 + $0xa8] sm:$0xff]
    %v47 = vld [vmem:[%s0 + $0xb0] sm:$0xff]
    %v48 = vld [vmem:[%s0 + $0xb8] sm:$0xff]
    %v49 = vld [vmem:[%s0 + $0xc0] sm:$0xff]
    %v50 = vld [vmem:[%s0 + $0xc8] sm:$0xff]
    %v51 = vld [vmem:[%s0 + $0xd0] sm:$0xff]
    %v52 = vld [vmem:[%s0 + $0xd8] sm:$0xff]
    %v53 = vld [vmem:[%s0 + $0xe0] sm:$0xff]
    %v54 = vld [vmem:[%s0 + $0xe8] sm:$0xff]
    %v55 = vld [vmem:[%s0 + $0xf0] sm:$0xff]
    %v56 = vld [vmem:[%s0 + $0xf8] sm:$0xff]
    %v57 = vld [vmem:[#allocation2 + $0x8] sm:$0xff]
    %v58 = vld [vmem:[#allocation2 + $0x18] sm:$0xff]
    %v59 = vld [vmem:[#allocation2 + $0x28] sm:$0x1]
    %63 = vrot.lane.b32.xlu0 %v57, 96
    %v64 = vpop.permute.xlu0 %63
    %65 = vrot.lane.b32.xlu0 %v58, 96
    %v66 = vpop.permute.xlu0 %65
    %67 = vrot.lane.b32.xlu0 %v59, 96
    %v68 = vpop.permute.xlu0 %67
    %vm71 = vcmask 138240
    %v73 = vsel %vm71, %v25, 0
    %v76 = vsel %vm71, %v26, 0
    %v79 = vsel %vm71, %v27, 0
    %v82 = vsel %vm71, %v28, 0
    %v85 = vsel %vm71, %v29, 0
    %v88 = vsel %vm71, %v30, 0
    %v91 = vsel %vm71, %v31, 0
    %v94 = vsel %vm71, %v32, 0
    %v97 = vsel %vm71, %v33, 0
    %v100 = vsel %vm71, %v34, 0
    %v103 = vsel %vm71, %v35, 0
    %v106 = vsel %vm71, %v36, 0
    %v109 = vsel %vm71, %v37, 0
    %v112 = vsel %vm71, %v38, 0
    %v115 = vsel %vm71, %v39, 0
    %v118 = vsel %vm71, %v40, 0
    %v121 = vsel %vm71, %v41, 0
    %v124 = vsel %vm71, %v42, 0
    %v127 = vsel %vm71, %v43, 0
    %v130 = vsel %vm71, %v44, 0
    %v133 = vsel %vm71, %v45, 0
    %v136 = vsel %vm71, %v46, 0
    %v139 = vsel %vm71, %v47, 0
    %v142 = vsel %vm71, %v48, 0
    %v145 = vsel %vm71, %v49, 0
    %v148 = vsel %vm71, %v50, 0
    %v151 = vsel %vm71, %v51, 0
    %v154 = vsel %vm71, %v52, 0
    %v157 = vsel %vm71, %v53, 0
    %v160 = vsel %vm71, %v54, 0
    %v163 = vsel %vm71, %v55, 0
    %v166 = vsel %vm71, %v56, 0
    %vm168 = vcmask 1040384
    %v169 = vsel %vm168, %v68, 0
    %171 = vmatprep.subr.mxu0 0.0
    %172 = vmatpush1.msra.mxu0 0.0
    %173 = vmatprep.subr.mxu0 0.0
    %174 = vmatpush1.msra.mxu0 0.0
    %175 = vmatprep.subr.mxu0 0.0
    %176 = vmatpush1.msra.mxu0 0.0
    %177 = vmatprep.subr.mxu0 0.0
    %178 = vmatpush1.msra.mxu0 0.0
    %179 = vmatprep.subr.mxu0 0.0
    %180 = vmatpush1.msra.mxu0 0.0
    %181 = vmatprep.subr.mxu0 0.0
    %182 = vmatpush1.msra.mxu0 0.0
    %183 = vmatprep.subr.mxu0 0.0
    %184 = vmatpush1.msra.mxu0 0.0
    %185 = vmatprep.subr.mxu0 0.0
    %186 = vmatpush1.msra.mxu0 0.0
    %187 = vmatprep.subr.mxu0 0.0
    %188 = vmatpush1.msra.mxu0 0.0
    %189 = vmatprep.subr.mxu0 0.0
    %190 = vmatpush1.msra.mxu0 0.0
    %191 = vmatprep.subr.mxu0 0.0
    %192 = vmatpush1.msra.mxu0 0.0
    %193 = vmatprep.subr.mxu0 0.0
    %194 = vmatpush1.msra.mxu0 0.0
    %195 = vmatprep.subr.mxu0 0.0
    %196 = vmatpush1.msra.mxu0 0.0
    %197 = vmatprep.subr.mxu0 0.0
    %198 = vmatpush1.msra.mxu0 %v169
    %199 = vmatprep.subr.mxu0 0.0
    %200 = vmatpush1.msra.mxu0 %v66
    %201 = vmatprep.subr.mxu0 0.0
    %202 = vmatpush1.msra.mxu0 %v64
    %203 = vmatprep.subr.mxu0 0.0
    %204 = vmatpush2.msra.mxu0 0.0
    %205 = vmatprep.subr.mxu0 0.0
    %206 = vmatpush2.msra.mxu0 0.0
    %207 = vmatprep.subr.mxu0 0.0
    %208 = vmatpush2.msra.mxu0 0.0
    %209 = vmatprep.subr.mxu0 0.0
    %210 = vmatpush2.msra.mxu0 0.0
    %211 = vmatprep.subr.mxu0 0.0
    %212 = vmatpush2.msra.mxu0 0.0
    %213 = vmatprep.subr.mxu0 0.0
    %214 = vmatpush2.msra.mxu0 0.0
    %215 = vmatprep.subr.mxu0 0.0
    %216 = vmatpush2.msra.mxu0 0.0
    %217 = vmatprep.subr.mxu0 0.0
    %218 = vmatpush2.msra.mxu0 0.0
    %219 = vmatprep.subr.mxu0 0.0
    %220 = vmatpush2.msra.mxu0 0.0
    %221 = vmatprep.subr.mxu0 0.0
    %222 = vmatpush2.msra.mxu0 0.0
    %223 = vmatprep.subr.mxu0 0.0
    %224 = vmatpush2.msra.mxu0 0.0
    %225 = vmatprep.subr.mxu0 0.0
    %226 = vmatpush2.msra.mxu0 0.0
    %227 = vmatprep.subr.mxu0 0.0
    %228 = vmatpush2.msra.mxu0 0.0
    %229 = vmatprep.subr.mxu0 0.0
    %230 = vmatpush2.msra.mxu0 0.0
    %231 = vmatprep.subr.mxu0 0.0
    %232 = vmatpush2.msra.mxu0 0.0
    %233 = vmatprep.subr.mxu0 0.0
    %234 = vmatpush2.msra.mxu0 0.0
    %235 = vmatprep.mubr.f32.mxu0 0.0
    %236 = vmatmul.mubr.f32.gmra.mxu0 %v73
    %v237 = vpop.f32.mrf.mxu0
    %v238 = vadd.f32 0.0, %v237
    %v239 = vpop.f32.mrf.mxu0
    %240 = vmatprep.mubr.f32.mxu0 0.0
    %241 = vmatmul.mubr.f32.gmra.mxu0 %v76
    %v242 = vpop.f32.mrf.mxu0
    %v243 = vadd.f32 0.0, %v242
    %v244 = vpop.f32.mrf.mxu0
    %245 = vmatprep.mubr.f32.mxu0 0.0
    %246 = vmatmul.mubr.f32.gmra.mxu0 %v79
    %v247 = vpop.f32.mrf.mxu0
    %v248 = vadd.f32 0.0, %v247
    %v249 = vpop.f32.mrf.mxu0
    %250 = vmatprep.mubr.f32.mxu0 0.0
    %251 = vmatmul.mubr.f32.gmra.mxu0 %v82
    %v252 = vpop.f32.mrf.mxu0
    %v253 = vadd.f32 0.0, %v252
    %v254 = vpop.f32.mrf.mxu0
    %255 = vmatprep.mubr.f32.mxu0 0.0
    %256 = vmatmul.mubr.f32.gmra.mxu0 %v85
    %v257 = vpop.f32.mrf.mxu0
    %v258 = vadd.f32 0.0, %v257
    %v259 = vpop.f32.mrf.mxu0
    %260 = vmatprep.mubr.f32.mxu0 0.0
    %261 = vmatmul.mubr.f32.gmra.mxu0 %v88
    %v262 = vpop.f32.mrf.mxu0
    %v263 = vadd.f32 0.0, %v262
    %v264 = vpop.f32.mrf.mxu0
    %265 = vmatprep.mubr.f32.mxu0 0.0
    %266 = vmatmul.mubr.f32.gmra.mxu0 %v91
    %v267 = vpop.f32.mrf.mxu0
    %v268 = vadd.f32 0.0, %v267
    %v269 = vpop.f32.mrf.mxu0
    %270 = vmatprep.mubr.f32.mxu0 0.0
    %271 = vmatmul.mubr.f32.gmra.mxu0 %v94
    %v272 = vpop.f32.mrf.mxu0
    %v273 = vadd.f32 0.0, %v272
    %v274 = vpop.f32.mrf.mxu0
    %275 = vmatprep.mubr.f32.mxu0 0.0
    %276 = vmatmul.mubr.f32.gmra.mxu0 %v97
    %v277 = vpop.f32.mrf.mxu0
    %v278 = vadd.f32 0.0, %v277
    %v279 = vpop.f32.mrf.mxu0
    %280 = vmatprep.mubr.f32.mxu0 0.0
    %281 = vmatmul.mubr.f32.gmra.mxu0 %v100
    %v282 = vpop.f32.mrf.mxu0
    %v283 = vadd.f32 0.0, %v282
    %v284 = vpop.f32.mrf.mxu0
    %285 = vmatprep.mubr.f32.mxu0 0.0
    %286 = vmatmul.mubr.f32.gmra.mxu0 %v103
    %v287 = vpop.f32.mrf.mxu0
    %v288 = vadd.f32 0.0, %v287
    %v289 = vpop.f32.mrf.mxu0
    %290 = vmatprep.mubr.f32.mxu0 0.0
    %291 = vmatmul.mubr.f32.gmra.mxu0 %v106
    %v292 = vpop.f32.mrf.mxu0
    %v293 = vadd.f32 0.0, %v292
    %v294 = vpop.f32.mrf.mxu0
    %295 = vmatprep.mubr.f32.mxu0 0.0
    %296 = vmatmul.mubr.f32.gmra.mxu0 %v109
    %v297 = vpop.f32.mrf.mxu0
    %v298 = vadd.f32 0.0, %v297
    %v299 = vpop.f32.mrf.mxu0
    %300 = vmatprep.mubr.f32.mxu0 0.0
    %301 = vmatmul.mubr.f32.gmra.mxu0 %v112
    %v302 = vpop.f32.mrf.mxu0
    %v303 = vadd.f32 0.0, %v302
    %v304 = vpop.f32.mrf.mxu0
    %305 = vmatprep.mubr.f32.mxu0 0.0
    %306 = vmatmul.mubr.f32.gmra.mxu0 %v115
    %v307 = vpop.f32.mrf.mxu0
    %v308 = vadd.f32 0.0, %v307
    %v309 = vpop.f32.mrf.mxu0
    %310 = vmatprep.mubr.f32.mxu0 0.0
    %311 = vmatmul.mubr.f32.gmra.mxu0 %v118
    %v312 = vpop.f32.mrf.mxu0
    %v313 = vadd.f32 0.0, %v312
    %v314 = vpop.f32.mrf.mxu0
    %315 = vmatprep.mubr.f32.mxu0 0.0
    %316 = vmatmul.mubr.f32.gmra.mxu0 %v121
    %v317 = vpop.f32.mrf.mxu0
    %v318 = vadd.f32 0.0, %v317
    %v319 = vpop.f32.mrf.mxu0
    %320 = vmatprep.mubr.f32.mxu0 0.0
    %321 = vmatmul.mubr.f32.gmra.mxu0 %v124
    %v322 = vpop.f32.mrf.mxu0
    %v323 = vadd.f32 0.0, %v322
    %v324 = vpop.f32.mrf.mxu0
    %325 = vmatprep.mubr.f32.mxu0 0.0
    %326 = vmatmul.mubr.f32.gmra.mxu0 %v127
    %v327 = vpop.f32.mrf.mxu0
    %v328 = vadd.f32 0.0, %v327
    %v329 = vpop.f32.mrf.mxu0
    %330 = vmatprep.mubr.f32.mxu0 0.0
    %331 = vmatmul.mubr.f32.gmra.mxu0 %v130
    %v332 = vpop.f32.mrf.mxu0
    %v333 = vadd.f32 0.0, %v332
    %v334 = vpop.f32.mrf.mxu0
    %335 = vmatprep.mubr.f32.mxu0 0.0
    %336 = vmatmul.mubr.f32.gmra.mxu0 %v133
    %v337 = vpop.f32.mrf.mxu0
    %v338 = vadd.f32 0.0, %v337
    %v339 = vpop.f32.mrf.mxu0
    %340 = vmatprep.mubr.f32.mxu0 0.0
    %341 = vmatmul.mubr.f32.gmra.mxu0 %v136
    %v342 = vpop.f32.mrf.mxu0
    %v343 = vadd.f32 0.0, %v342
    %v344 = vpop.f32.mrf.mxu0
    %345 = vmatprep.mubr.f32.mxu0 0.0
    %346 = vmatmul.mubr.f32.gmra.mxu0 %v139
    %v347 = vpop.f32.mrf.mxu0
    %v348 = vadd.f32 0.0, %v347
    %v349 = vpop.f32.mrf.mxu0
    %350 = vmatprep.mubr.f32.mxu0 0.0
    %351 = vmatmul.mubr.f32.gmra.mxu0 %v142
    %v352 = vpop.f32.mrf.mxu0
    %v353 = vadd.f32 0.0, %v352
    %v354 = vpop.f32.mrf.mxu0
    %355 = vmatprep.mubr.f32.mxu0 0.0
    %356 = vmatmul.mubr.f32.gmra.mxu0 %v145
    %v357 = vpop.f32.mrf.mxu0
    %v358 = vadd.f32 0.0, %v357
    %v359 = vpop.f32.mrf.mxu0
    %360 = vmatprep.mubr.f32.mxu0 0.0
    %361 = vmatmul.mubr.f32.gmra.mxu0 %v148
    %v362 = vpop.f32.mrf.mxu0
    %v363 = vadd.f32 0.0, %v362
    %v364 = vpop.f32.mrf.mxu0
    %365 = vmatprep.mubr.f32.mxu0 0.0
    %366 = vmatmul.mubr.f32.gmra.mxu0 %v151
    %v367 = vpop.f32.mrf.mxu0
    %v368 = vadd.f32 0.0, %v367
    %v369 = vpop.f32.mrf.mxu0
    %370 = vmatprep.mubr.f32.mxu0 0.0
    %371 = vmatmul.mubr.f32.gmra.mxu0 %v154
    %v372 = vpop.f32.mrf.mxu0
    %v373 = vadd.f32 0.0, %v372
    %v374 = vpop.f32.mrf.mxu0
    %375 = vmatprep.mubr.f32.mxu0 0.0
    %376 = vmatmul.mubr.f32.gmra.mxu0 %v157
    %v377 = vpop.f32.mrf.mxu0
    %v378 = vadd.f32 0.0, %v377
    %v379 = vpop.f32.mrf.mxu0
    %380 = vmatprep.mubr.f32.mxu0 0.0
    %381 = vmatmul.mubr.f32.gmra.mxu0 %v160
    %v382 = vpop.f32.mrf.mxu0
    %v383 = vadd.f32 0.0, %v382
    %v384 = vpop.f32.mrf.mxu0
    %385 = vmatprep.mubr.f32.mxu0 0.0
    %386 = vmatmul.mubr.f32.gmra.mxu0 %v163
    %v387 = vpop.f32.mrf.mxu0
    %v388 = vadd.f32 0.0, %v387
    %v389 = vpop.f32.mrf.mxu0
    %390 = vmatprep.mubr.f32.mxu0 0.0
    %391 = vmatmul.mubr.f32.gmra.mxu0 %v166
    %v392 = vpop.f32.mrf.mxu0
    %v393 = vadd.f32 0.0, %v392
    %v394 = vpop.f32.mrf.mxu0
    %395 = vdwg.mxu0
    %vm396 = vcmp.gt.f32.partialorder %v238, 0.0
    %vm397 = vcmp.gt.f32.partialorder %v243, 0.0
    %vm398 = vcmp.gt.f32.partialorder %v248, 0.0
    %vm399 = vcmp.gt.f32.partialorder %v253, 0.0
    %vm400 = vcmp.gt.f32.partialorder %v258, 0.0
    %vm401 = vcmp.gt.f32.partialorder %v263, 0.0
    %vm402 = vcmp.gt.f32.partialorder %v268, 0.0
    %vm403 = vcmp.gt.f32.partialorder %v273, 0.0
    %vm404 = vcmp.gt.f32.partialorder %v278, 0.0
    %vm405 = vcmp.gt.f32.partialorder %v283, 0.0
    %vm406 = vcmp.gt.f32.partialorder %v288, 0.0
    %vm407 = vcmp.gt.f32.partialorder %v293, 0.0
    %vm408 = vcmp.gt.f32.partialorder %v298, 0.0
    %vm409 = vcmp.gt.f32.partialorder %v303, 0.0
    %vm410 = vcmp.gt.f32.partialorder %v308, 0.0
    %vm411 = vcmp.gt.f32.partialorder %v313, 0.0
    %vm412 = vcmp.gt.f32.partialorder %v318, 0.0
    %vm413 = vcmp.gt.f32.partialorder %v323, 0.0
    %vm414 = vcmp.gt.f32.partialorder %v328, 0.0
    %vm415 = vcmp.gt.f32.partialorder %v333, 0.0
    %vm416 = vcmp.gt.f32.partialorder %v338, 0.0
    %vm417 = vcmp.gt.f32.partialorder %v343, 0.0
    %vm418 = vcmp.gt.f32.partialorder %v348, 0.0
    %vm419 = vcmp.gt.f32.partialorder %v353, 0.0
    %vm420 = vcmp.gt.f32.partialorder %v358, 0.0
    %vm421 = vcmp.gt.f32.partialorder %v363, 0.0
    %vm422 = vcmp.gt.f32.partialorder %v368, 0.0
    %vm423 = vcmp.gt.f32.partialorder %v373, 0.0
    %vm424 = vcmp.gt.f32.partialorder %v378, 0.0
    %vm425 = vcmp.gt.f32.partialorder %v383, 0.0
    %vm426 = vcmp.gt.f32.partialorder %v388, 0.0
    %vm427 = vcmp.gt.f32.partialorder %v393, 0.0
    %v428 = vmul.f32 %v238, 0.2
    %v429 = vmul.f32 %v243, 0.2
    %v430 = vmul.f32 %v248, 0.2
    %v431 = vmul.f32 %v253, 0.2
    %v432 = vmul.f32 %v258, 0.2
    %v433 = vmul.f32 %v263, 0.2
    %v434 = vmul.f32 %v268, 0.2
    %v435 = vmul.f32 %v273, 0.2
    %v436 = vmul.f32 %v278, 0.2
    %v437 = vmul.f32 %v283, 0.2
    %v438 = vmul.f32 %v288, 0.2
    %v439 = vmul.f32 %v293, 0.2
    %v440 = vmul.f32 %v298, 0.2
    %v441 = vmul.f32 %v303, 0.2
    %v442 = vmul.f32 %v308, 0.2
    %v443 = vmul.f32 %v313, 0.2
    %v444 = vmul.f32 %v318, 0.2
    %v445 = vmul.f32 %v323, 0.2
    %v446 = vmul.f32 %v328, 0.2
    %v447 = vmul.f32 %v333, 0.2
    %v448 = vmul.f32 %v338, 0.2
    %v449 = vmul.f32 %v343, 0.2
    %v450 = vmul.f32 %v348, 0.2
    %v451 = vmul.f32 %v353, 0.2
    %v452 = vmul.f32 %v358, 0.2
    %v453 = vmul.f32 %v363, 0.2
    %v454 = vmul.f32 %v368, 0.2
    %v455 = vmul.f32 %v373, 0.2
    %v456 = vmul.f32 %v378, 0.2
    %v457 = vmul.f32 %v383, 0.2
    %v458 = vmul.f32 %v388, 0.2
    %v459 = vmul.f32 %v393, 0.2
    %v460 = vsel %vm396, %v238, %v428
    %v461 = vsel %vm397, %v243, %v429
    %v462 = vsel %vm398, %v248, %v430
    %v463 = vsel %vm399, %v253, %v431
    %v464 = vsel %vm400, %v258, %v432
    %v465 = vsel %vm401, %v263, %v433
    %v466 = vsel %vm402, %v268, %v434
    %v467 = vsel %vm403, %v273, %v435
    %v468 = vsel %vm404, %v278, %v436
    %v469 = vsel %vm405, %v283, %v437
    %v470 = vsel %vm406, %v288, %v438
    %v471 = vsel %vm407, %v293, %v439
    %v472 = vsel %vm408, %v298, %v440
    %v473 = vsel %vm409, %v303, %v441
    %v474 = vsel %vm410, %v308, %v442
    %v475 = vsel %vm411, %v313, %v443
    %v476 = vsel %vm412, %v318, %v444
    %v477 = vsel %vm413, %v323, %v445
    %v478 = vsel %vm414, %v328, %v446
    %v479 = vsel %vm415, %v333, %v447
    %v480 = vsel %vm416, %v338, %v448
    %v481 = vsel %vm417, %v343, %v449
    %v482 = vsel %vm418, %v348, %v450
    %v483 = vsel %vm419, %v353, %v451
    %v484 = vsel %vm420, %v358, %v452
    %v485 = vsel %vm421, %v363, %v453
    %v486 = vsel %vm422, %v368, %v454
    %v487 = vsel %vm423, %v373, %v455
    %v488 = vsel %vm424, %v378, %v456
    %v489 = vsel %vm425, %v383, %v457
    %v490 = vsel %vm426, %v388, %v458
    %v491 = vsel %vm427, %v393, %v459
    %v492 = vld [vmem:[#allocation2 + $0x8] sm:$0xff]
    %v493 = vld [vmem:[#allocation2 + $0x18] sm:$0xff]
    %v494 = vld [vmem:[#allocation2 + $0x28] sm:$0xff]
    %v495 = vld [vmem:[#allocation2 + $0x38] sm:$0xff]
    %v496 = vld [vmem:[#allocation2 + $0x48] ss:$0 sm:$0xff]
    %501 = vrot.lane.b32.xlu0 %v492, 40
    %v502 = vpop.permute.xlu0 %501
    %503 = vrot.lane.b32.xlu0 %v493, 40
    %v504 = vpop.permute.xlu0 %503
    %505 = vrot.lane.b32.xlu0 %v494, 40
    %v506 = vpop.permute.xlu0 %505
    %507 = vrot.lane.b32.xlu0 %v495, 40
    %v508 = vpop.permute.xlu0 %507
    %514 = vrot.lane.b32.xlu0 %v496, 40
    %v515 = vpop.permute.xlu0 %514
    %vm517 = vcmask 261120
    %v519 = vsel %vm517, %v460, 0
    %v522 = vsel %vm517, %v461, 0
    %v525 = vsel %vm517, %v462, 0
    %v528 = vsel %vm517, %v463, 0
    %v531 = vsel %vm517, %v464, 0
    %v534 = vsel %vm517, %v465, 0
    %v537 = vsel %vm517, %v466, 0
    %v540 = vsel %vm517, %v467, 0
    %v543 = vsel %vm517, %v468, 0
    %v546 = vsel %vm517, %v469, 0
    %v549 = vsel %vm517, %v470, 0
    %v552 = vsel %vm517, %v471, 0
    %v555 = vsel %vm517, %v472, 0
    %v558 = vsel %vm517, %v473, 0
    %v561 = vsel %vm517, %v474, 0
    %v564 = vsel %vm517, %v475, 0
    %v567 = vsel %vm517, %v476, 0
    %v570 = vsel %vm517, %v477, 0
    %v573 = vsel %vm517, %v478, 0
    %v576 = vsel %vm517, %v479, 0
    %v579 = vsel %vm517, %v480, 0
    %v582 = vsel %vm517, %v481, 0
    %v585 = vsel %vm517, %v482, 0
    %v588 = vsel %vm517, %v483, 0
    %v591 = vsel %vm517, %v484, 0
    %v594 = vsel %vm517, %v485, 0
    %v597 = vsel %vm517, %v486, 0
    %v600 = vsel %vm517, %v487, 0
    %v603 = vsel %vm517, %v488, 0
    %v606 = vsel %vm517, %v489, 0
    %v609 = vsel %vm517, %v490, 0
    %v612 = vsel %vm517, %v491, 0
    %614 = vmatprep.subr.mxu0 0.0
    %615 = vmatpush1.msra.mxu0 0.0
    %616 = vmatprep.subr.mxu0 0.0
    %617 = vmatpush1.msra.mxu0 0.0
    %618 = vmatprep.subr.mxu0 0.0
    %619 = vmatpush1.msra.mxu0 0.0
    %620 = vmatprep.subr.mxu0 0.0
    %621 = vmatpush1.msra.mxu0 0.0
    %622 = vmatprep.subr.mxu0 0.0
    %623 = vmatpush1.msra.mxu0 0.0
    %624 = vmatprep.subr.mxu0 0.0
    %625 = vmatpush1.msra.mxu0 0.0
    %626 = vmatprep.subr.mxu0 0.0
    %627 = vmatpush1.msra.mxu0 0.0
    %628 = vmatprep.subr.mxu0 0.0
    %629 = vmatpush1.msra.mxu0 0.0
    %630 = vmatprep.subr.mxu0 0.0
    %631 = vmatpush1.msra.mxu0 0.0
    %632 = vmatprep.subr.mxu0 0.0
    %633 = vmatpush1.msra.mxu0 0.0
    %634 = vmatprep.subr.mxu0 0.0
    %635 = vmatpush1.msra.mxu0 0.0
    %636 = vmatprep.subr.mxu0 0.0
    %637 = vmatpush1.msra.mxu0 0.0
    %638 = vmatprep.subr.mxu0 0.0
    %639 = vmatpush1.msra.mxu0 %v508
    %640 = vmatprep.subr.mxu0 0.0
    %641 = vmatpush1.msra.mxu0 %v506
    %642 = vmatprep.subr.mxu0 0.0
    %643 = vmatpush1.msra.mxu0 %v504
    %644 = vmatprep.subr.mxu0 0.0
    %645 = vmatpush1.msra.mxu0 %v502
    %646 = vmatprep.subr.mxu0 0.0
    %647 = vmatpush2.msra.mxu0 0.0
    %648 = vmatprep.subr.mxu0 0.0
    %649 = vmatpush2.msra.mxu0 0.0
    %650 = vmatprep.subr.mxu0 0.0
    %651 = vmatpush2.msra.mxu0 0.0
    %652 = vmatprep.subr.mxu0 0.0
    %653 = vmatpush2.msra.mxu0 0.0
    %654 = vmatprep.subr.mxu0 0.0
    %655 = vmatpush2.msra.mxu0 0.0
    %656 = vmatprep.subr.mxu0 0.0
    %657 = vmatpush2.msra.mxu0 0.0
    %658 = vmatprep.subr.mxu0 0.0
    %659 = vmatpush2.msra.mxu0 0.0
    %660 = vmatprep.subr.mxu0 0.0
    %661 = vmatpush2.msra.mxu0 0.0
    %662 = vmatprep.subr.mxu0 0.0
    %663 = vmatpush2.msra.mxu0 0.0
    %664 = vmatprep.subr.mxu0 0.0
    %665 = vmatpush2.msra.mxu0 0.0
    %666 = vmatprep.subr.mxu0 0.0
    %667 = vmatpush2.msra.mxu0 0.0
    %668 = vmatprep.subr.mxu0 0.0
    %669 = vmatpush2.msra.mxu0 0.0
    %670 = vmatprep.subr.mxu0 0.0
    %671 = vmatpush2.msra.mxu0 0.0
    %672 = vmatprep.subr.mxu0 0.0
    %673 = vmatpush2.msra.mxu0 0.0
    %674 = vmatprep.subr.mxu0 0.0
    %675 = vmatpush2.msra.mxu0 0.0
    %676 = vmatprep.subr.mxu0 0.0
    %677 = vmatpush2.msra.mxu0 0.0
    %678 = vmatprep.mubr.f32.mxu0 0.0
    %679 = vmatmul.mubr.f32.gmra.mxu0 %v519
    %v680 = vpop.f32.mrf.mxu0
    %v681 = vadd.f32 %v515, %v680
    %v682 = vpop.f32.mrf.mxu0
    %683 = vmatprep.mubr.f32.mxu0 0.0
    %684 = vmatmul.mubr.f32.gmra.mxu0 %v522
    %v685 = vpop.f32.mrf.mxu0
    %v686 = vadd.f32 %v515, %v685
    %v687 = vpop.f32.mrf.mxu0
    %688 = vmatprep.mubr.f32.mxu0 0.0
    %689 = vmatmul.mubr.f32.gmra.mxu0 %v525
    %v690 = vpop.f32.mrf.mxu0
    %v691 = vadd.f32 %v515, %v690
    %v692 = vpop.f32.mrf.mxu0
    %693 = vmatprep.mubr.f32.mxu0 0.0
    %694 = vmatmul.mubr.f32.gmra.mxu0 %v528
    %v695 = vpop.f32.mrf.mxu0
    %v696 = vadd.f32 %v515, %v695
    %v697 = vpop.f32.mrf.mxu0
    %698 = vmatprep.mubr.f32.mxu0 0.0
    %699 = vmatmul.mubr.f32.gmra.mxu0 %v531
    %v700 = vpop.f32.mrf.mxu0
    %v701 = vadd.f32 %v515, %v700
    %v702 = vpop.f32.mrf.mxu0
    %703 = vmatprep.mubr.f32.mxu0 0.0
    %704 = vmatmul.mubr.f32.gmra.mxu0 %v534
    %v705 = vpop.f32.mrf.mxu0
    %v706 = vadd.f32 %v515, %v705
    %v707 = vpop.f32.mrf.mxu0
    %708 = vmatprep.mubr.f32.mxu0 0.0
    %709 = vmatmul.mubr.f32.gmra.mxu0 %v537
    %v710 = vpop.f32.mrf.mxu0
    %v711 = vadd.f32 %v515, %v710
    %v712 = vpop.f32.mrf.mxu0
    %713 = vmatprep.mubr.f32.mxu0 0.0
    %714 = vmatmul.mubr.f32.gmra.mxu0 %v540
    %v715 = vpop.f32.mrf.mxu0
    %v716 = vadd.f32 %v515, %v715
    %v717 = vpop.f32.mrf.mxu0
    %718 = vmatprep.mubr.f32.mxu0 0.0
    %719 = vmatmul.mubr.f32.gmra.mxu0 %v543
    %v720 = vpop.f32.mrf.mxu0
    %v721 = vadd.f32 %v515, %v720
    %v722 = vpop.f32.mrf.mxu0
    %723 = vmatprep.mubr.f32.mxu0 0.0
    %724 = vmatmul.mubr.f32.gmra.mxu0 %v546
    %v725 = vpop.f32.mrf.mxu0
    %v726 = vadd.f32 %v515, %v725
    %v727 = vpop.f32.mrf.mxu0
    %728 = vmatprep.mubr.f32.mxu0 0.0
    %729 = vmatmul.mubr.f32.gmra.mxu0 %v549
    %v730 = vpop.f32.mrf.mxu0
    %v731 = vadd.f32 %v515, %v730
    %v732 = vpop.f32.mrf.mxu0
    %733 = vmatprep.mubr.f32.mxu0 0.0
    %734 = vmatmul.mubr.f32.gmra.mxu0 %v552
    %v735 = vpop.f32.mrf.mxu0
    %v736 = vadd.f32 %v515, %v735
    %v737 = vpop.f32.mrf.mxu0
    %738 = vmatprep.mubr.f32.mxu0 0.0
    %739 = vmatmul.mubr.f32.gmra.mxu0 %v555
    %v740 = vpop.f32.mrf.mxu0
    %v741 = vadd.f32 %v515, %v740
    %v742 = vpop.f32.mrf.mxu0
    %743 = vmatprep.mubr.f32.mxu0 0.0
    %744 = vmatmul.mubr.f32.gmra.mxu0 %v558
    %v745 = vpop.f32.mrf.mxu0
    %v746 = vadd.f32 %v515, %v745
    %v747 = vpop.f32.mrf.mxu0
    %748 = vmatprep.mubr.f32.mxu0 0.0
    %749 = vmatmul.mubr.f32.gmra.mxu0 %v561
    %v750 = vpop.f32.mrf.mxu0
    %v751 = vadd.f32 %v515, %v750
    %v752 = vpop.f32.mrf.mxu0
    %753 = vmatprep.mubr.f32.mxu0 0.0
    %754 = vmatmul.mubr.f32.gmra.mxu0 %v564
    %v755 = vpop.f32.mrf.mxu0
    %v756 = vadd.f32 %v515, %v755
    %v757 = vpop.f32.mrf.mxu0
    %758 = vmatprep.mubr.f32.mxu0 0.0
    %759 = vmatmul.mubr.f32.gmra.mxu0 %v567
    %v760 = vpop.f32.mrf.mxu0
    %v761 = vadd.f32 %v515, %v760
    %v762 = vpop.f32.mrf.mxu0
    %763 = vmatprep.mubr.f32.mxu0 0.0
    %764 = vmatmul.mubr.f32.gmra.mxu0 %v570
    %v765 = vpop.f32.mrf.mxu0
    %v766 = vadd.f32 %v515, %v765
    %v767 = vpop.f32.mrf.mxu0
    %768 = vmatprep.mubr.f32.mxu0 0.0
    %769 = vmatmul.mubr.f32.gmra.mxu0 %v573
    %v770 = vpop.f32.mrf.mxu0
    %v771 = vadd.f32 %v515, %v770
    %v772 = vpop.f32.mrf.mxu0
    %773 = vmatprep.mubr.f32.mxu0 0.0
    %774 = vmatmul.mubr.f32.gmra.mxu0 %v576
    %v775 = vpop.f32.mrf.mxu0
    %v776 = vadd.f32 %v515, %v775
    %v777 = vpop.f32.mrf.mxu0
    %778 = vmatprep.mubr.f32.mxu0 0.0
    %779 = vmatmul.mubr.f32.gmra.mxu0 %v579
    %v780 = vpop.f32.mrf.mxu0
    %v781 = vadd.f32 %v515, %v780
    %v782 = vpop.f32.mrf.mxu0
    %783 = vmatprep.mubr.f32.mxu0 0.0
    %784 = vmatmul.mubr.f32.gmra.mxu0 %v582
    %v785 = vpop.f32.mrf.mxu0
    %v786 = vadd.f32 %v515, %v785
    %v787 = vpop.f32.mrf.mxu0
    %788 = vmatprep.mubr.f32.mxu0 0.0
    %789 = vmatmul.mubr.f32.gmra.mxu0 %v585
    %v790 = vpop.f32.mrf.mxu0
    %v791 = vadd.f32 %v515, %v790
    %v792 = vpop.f32.mrf.mxu0
    %793 = vmatprep.mubr.f32.mxu0 0.0
    %794 = vmatmul.mubr.f32.gmra.mxu0 %v588
    %v795 = vpop.f32.mrf.mxu0
    %v796 = vadd.f32 %v515, %v795
    %v797 = vpop.f32.mrf.mxu0
    %798 = vmatprep.mubr.f32.mxu0 0.0
    %799 = vmatmul.mubr.f32.gmra.mxu0 %v591
    %v800 = vpop.f32.mrf.mxu0
    %v801 = vadd.f32 %v515, %v800
    %v802 = vpop.f32.mrf.mxu0
    %803 = vmatprep.mubr.f32.mxu0 0.0
    %804 = vmatmul.mubr.f32.gmra.mxu0 %v594
    %v805 = vpop.f32.mrf.mxu0
    %v806 = vadd.f32 %v515, %v805
    %v807 = vpop.f32.mrf.mxu0
    %808 = vmatprep.mubr.f32.mxu0 0.0
    %809 = vmatmul.mubr.f32.gmra.mxu0 %v597
    %v810 = vpop.f32.mrf.mxu0
    %v811 = vadd.f32 %v515, %v810
    %v812 = vpop.f32.mrf.mxu0
    %813 = vmatprep.mubr.f32.mxu0 0.0
    %814 = vmatmul.mubr.f32.gmra.mxu0 %v600
    %v815 = vpop.f32.mrf.mxu0
    %v816 = vadd.f32 %v515, %v815
    %v817 = vpop.f32.mrf.mxu0
    %818 = vmatprep.mubr.f32.mxu0 0.0
    %819 = vmatmul.mubr.f32.gmra.mxu0 %v603
    %v820 = vpop.f32.mrf.mxu0
    %v821 = vadd.f32 %v515, %v820
    %v822 = vpop.f32.mrf.mxu0
    %823 = vmatprep.mubr.f32.mxu0 0.0
    %824 = vmatmul.mubr.f32.gmra.mxu0 %v606
    %v825 = vpop.f32.mrf.mxu0
    %v826 = vadd.f32 %v515, %v825
    %v827 = vpop.f32.mrf.mxu0
    %828 = vmatprep.mubr.f32.mxu0 0.0
    %829 = vmatmul.mubr.f32.gmra.mxu0 %v609
    %v830 = vpop.f32.mrf.mxu0
    %v831 = vadd.f32 %v515, %v830
    %v832 = vpop.f32.mrf.mxu0
    %833 = vmatprep.mubr.f32.mxu0 0.0
    %834 = vmatmul.mubr.f32.gmra.mxu0 %v612
    %v835 = vpop.f32.mrf.mxu0
    %v836 = vadd.f32 %v515, %v835
    %v837 = vpop.f32.mrf.mxu0
    %838 = vdwg.mxu0
    %vm839 = vcmp.gt.f32.partialorder %v681, 0.0
    %vm840 = vcmp.gt.f32.partialorder %v686, 0.0
    %vm841 = vcmp.gt.f32.partialorder %v691, 0.0
    %vm842 = vcmp.gt.f32.partialorder %v696, 0.0
    %vm843 = vcmp.gt.f32.partialorder %v701, 0.0
    %vm844 = vcmp.gt.f32.partialorder %v706, 0.0
    %vm845 = vcmp.gt.f32.partialorder %v711, 0.0
    %vm846 = vcmp.gt.f32.partialorder %v716, 0.0
    %vm847 = vcmp.gt.f32.partialorder %v721, 0.0
    %vm848 = vcmp.gt.f32.partialorder %v726, 0.0
    %vm849 = vcmp.gt.f32.partialorder %v731, 0.0
    %vm850 = vcmp.gt.f32.partialorder %v736, 0.0
    %vm851 = vcmp.gt.f32.partialorder %v741, 0.0
    %vm852 = vcmp.gt.f32.partialorder %v746, 0.0
    %vm853 = vcmp.gt.f32.partialorder %v751, 0.0
    %vm854 = vcmp.gt.f32.partialorder %v756, 0.0
    %vm855 = vcmp.gt.f32.partialorder %v761, 0.0
    %vm856 = vcmp.gt.f32.partialorder %v766, 0.0
    %vm857 = vcmp.gt.f32.partialorder %v771, 0.0
    %vm858 = vcmp.gt.f32.partialorder %v776, 0.0
    %vm859 = vcmp.gt.f32.partialorder %v781, 0.0
    %vm860 = vcmp.gt.f32.partialorder %v786, 0.0
    %vm861 = vcmp.gt.f32.partialorder %v791, 0.0
    %vm862 = vcmp.gt.f32.partialorder %v796, 0.0
    %vm863 = vcmp.gt.f32.partialorder %v801, 0.0
    %vm864 = vcmp.gt.f32.partialorder %v806, 0.0
    %vm865 = vcmp.gt.f32.partialorder %v811, 0.0
    %vm866 = vcmp.gt.f32.partialorder %v816, 0.0
    %vm867 = vcmp.gt.f32.partialorder %v821, 0.0
    %vm868 = vcmp.gt.f32.partialorder %v826, 0.0
    %vm869 = vcmp.gt.f32.partialorder %v831, 0.0
    %vm870 = vcmp.gt.f32.partialorder %v836, 0.0
    %v871 = vmul.f32 %v681, 0.2
    %v872 = vmul.f32 %v686, 0.2
    %v873 = vmul.f32 %v691, 0.2
    %v874 = vmul.f32 %v696, 0.2
    %v875 = vmul.f32 %v701, 0.2
    %v876 = vmul.f32 %v706, 0.2
    %v877 = vmul.f32 %v711, 0.2
    %v878 = vmul.f32 %v716, 0.2
    %v879 = vmul.f32 %v721, 0.2
    %v880 = vmul.f32 %v726, 0.2
    %v881 = vmul.f32 %v731, 0.2
    %v882 = vmul.f32 %v736, 0.2
    %v883 = vmul.f32 %v741, 0.2
    %v884 = vmul.f32 %v746, 0.2
    %v885 = vmul.f32 %v751, 0.2
    %v886 = vmul.f32 %v756, 0.2
    %v887 = vmul.f32 %v761, 0.2
    %v888 = vmul.f32 %v766, 0.2
    %v889 = vmul.f32 %v771, 0.2
    %v890 = vmul.f32 %v776, 0.2
    %v891 = vmul.f32 %v781, 0.2
    %v892 = vmul.f32 %v786, 0.2
    %v893 = vmul.f32 %v791, 0.2
    %v894 = vmul.f32 %v796, 0.2
    %v895 = vmul.f32 %v801, 0.2
    %v896 = vmul.f32 %v806, 0.2
    %v897 = vmul.f32 %v811, 0.2
    %v898 = vmul.f32 %v816, 0.2
    %v899 = vmul.f32 %v821, 0.2
    %v900 = vmul.f32 %v826, 0.2
    %v901 = vmul.f32 %v831, 0.2
    %v902 = vmul.f32 %v836, 0.2
    %v903 = vsel %vm839, %v681, %v871
    %v904 = vsel %vm840, %v686, %v872
    %v905 = vsel %vm841, %v691, %v873
    %v906 = vsel %vm842, %v696, %v874
    %v907 = vsel %vm843, %v701, %v875
    %v908 = vsel %vm844, %v706, %v876
    %v909 = vsel %vm845, %v711, %v877
    %v910 = vsel %vm846, %v716, %v878
    %v911 = vsel %vm847, %v721, %v879
    %v912 = vsel %vm848, %v726, %v880
    %v913 = vsel %vm849, %v731, %v881
    %v914 = vsel %vm850, %v736, %v882
    %v915 = vsel %vm851, %v741, %v883
    %v916 = vsel %vm852, %v746, %v884
    %v917 = vsel %vm853, %v751, %v885
    %v918 = vsel %vm854, %v756, %v886
    %v919 = vsel %vm855, %v761, %v887
    %v920 = vsel %vm856, %v766, %v888
    %v921 = vsel %vm857, %v771, %v889
    %v922 = vsel %vm858, %v776, %v890
    %v923 = vsel %vm859, %v781, %v891
    %v924 = vsel %vm860, %v786, %v892
    %v925 = vsel %vm861, %v791, %v893
    %v926 = vsel %vm862, %v796, %v894
    %v927 = vsel %vm863, %v801, %v895
    %v928 = vsel %vm864, %v806, %v896
    %v929 = vsel %vm865, %v811, %v897
    %v930 = vsel %vm866, %v816, %v898
    %v931 = vsel %vm867, %v821, %v899
    %v932 = vsel %vm868, %v826, %v900
    %v933 = vsel %vm869, %v831, %v901
    %v934 = vsel %vm870, %v836, %v902
    %935 = vrot.lane.b32.xlu0 %v25, 120
    %v936 = vpop.permute.xlu0 %935
    %937 = vrot.lane.b32.xlu0 %v26, 120
    %v938 = vpop.permute.xlu0 %937
    %939 = vrot.lane.b32.xlu0 %v27, 120
    %v940 = vpop.permute.xlu0 %939
    %941 = vrot.lane.b32.xlu0 %v28, 120
    %v942 = vpop.permute.xlu0 %941
    %943 = vrot.lane.b32.xlu0 %v29, 120
    %v944 = vpop.permute.xlu0 %943
    %945 = vrot.lane.b32.xlu0 %v30, 120
    %v946 = vpop.permute.xlu0 %945
    %947 = vrot.lane.b32.xlu0 %v31, 120
    %v948 = vpop.permute.xlu0 %947
    %949 = vrot.lane.b32.xlu0 %v32, 120
    %v950 = vpop.permute.xlu0 %949
    %951 = vrot.lane.b32.xlu0 %v33, 120
    %v952 = vpop.permute.xlu0 %951
    %953 = vrot.lane.b32.xlu0 %v34, 120
    %v954 = vpop.permute.xlu0 %953
    %955 = vrot.lane.b32.xlu0 %v35, 120
    %v956 = vpop.permute.xlu0 %955
    %957 = vrot.lane.b32.xlu0 %v36, 120
    %v958 = vpop.permute.xlu0 %957
    %959 = vrot.lane.b32.xlu0 %v37, 120
    %v960 = vpop.permute.xlu0 %959
    %961 = vrot.lane.b32.xlu0 %v38, 120
    %v962 = vpop.permute.xlu0 %961
    %963 = vrot.lane.b32.xlu0 %v39, 120
    %v964 = vpop.permute.xlu0 %963
    %965 = vrot.lane.b32.xlu0 %v40, 120
    %v966 = vpop.permute.xlu0 %965
    %967 = vrot.lane.b32.xlu0 %v41, 120
    %v968 = vpop.permute.xlu0 %967
    %969 = vrot.lane.b32.xlu0 %v42, 120
    %v970 = vpop.permute.xlu0 %969
    %971 = vrot.lane.b32.xlu0 %v43, 120
    %v972 = vpop.permute.xlu0 %971
    %973 = vrot.lane.b32.xlu0 %v44, 120
    %v974 = vpop.permute.xlu0 %973
    %975 = vrot.lane.b32.xlu0 %v45, 120
    %v976 = vpop.permute.xlu0 %975
    %977 = vrot.lane.b32.xlu0 %v46, 120
    %v978 = vpop.permute.xlu0 %977
    %979 = vrot.lane.b32.xlu0 %v47, 120
    %v980 = vpop.permute.xlu0 %979
    %981 = vrot.lane.b32.xlu0 %v48, 120
    %v982 = vpop.permute.xlu0 %981
    %983 = vrot.lane.b32.xlu0 %v49, 120
    %v984 = vpop.permute.xlu0 %983
    %985 = vrot.lane.b32.xlu0 %v50, 120
    %v986 = vpop.permute.xlu0 %985
    %987 = vrot.lane.b32.xlu0 %v51, 120
    %v988 = vpop.permute.xlu0 %987
    %989 = vrot.lane.b32.xlu0 %v52, 120
    %v990 = vpop.permute.xlu0 %989
    %991 = vrot.lane.b32.xlu0 %v53, 120
    %v992 = vpop.permute.xlu0 %991
    %993 = vrot.lane.b32.xlu0 %v54, 120
    %v994 = vpop.permute.xlu0 %993
    %995 = vrot.lane.b32.xlu0 %v55, 120
    %v996 = vpop.permute.xlu0 %995
    %997 = vrot.lane.b32.xlu0 %v56, 120
    %v998 = vpop.permute.xlu0 %997
    %1031 = vrot.lane.b32.xlu0 %v25, 124
    %v1032 = vpop.permute.xlu0 %1031
    %1033 = vrot.lane.b32.xlu0 %v26, 124
    %v1034 = vpop.permute.xlu0 %1033
    %1035 = vrot.lane.b32.xlu0 %v27, 124
    %v1036 = vpop.permute.xlu0 %1035
    %1037 = vrot.lane.b32.xlu0 %v28, 124
    %v1038 = vpop.permute.xlu0 %1037
    %1039 = vrot.lane.b32.xlu0 %v29, 124
    %v1040 = vpop.permute.xlu0 %1039
    %1041 = vrot.lane.b32.xlu0 %v30, 124
    %v1042 = vpop.permute.xlu0 %1041
    %1043 = vrot.lane.b32.xlu0 %v31, 124
    %v1044 = vpop.permute.xlu0 %1043
    %1045 = vrot.lane.b32.xlu0 %v32, 124
    %v1046 = vpop.permute.xlu0 %1045
    %1047 = vrot.lane.b32.xlu0 %v33, 124
    %v1048 = vpop.permute.xlu0 %1047
    %1049 = vrot.lane.b32.xlu0 %v34, 124
    %v1050 = vpop.permute.xlu0 %1049
    %1051 = vrot.lane.b32.xlu0 %v35, 124
    %v1052 = vpop.permute.xlu0 %1051
    %1053 = vrot.lane.b32.xlu0 %v36, 124
    %v1054 = vpop.permute.xlu0 %1053
    %1055 = vrot.lane.b32.xlu0 %v37, 124
    %v1056 = vpop.permute.xlu0 %1055
    %1057 = vrot.lane.b32.xlu0 %v38, 124
    %v1058 = vpop.permute.xlu0 %1057
    %1059 = vrot.lane.b32.xlu0 %v39, 124
    %v1060 = vpop.permute.xlu0 %1059
    %1061 = vrot.lane.b32.xlu0 %v40, 124
    %v1062 = vpop.permute.xlu0 %1061
    %1063 = vrot.lane.b32.xlu0 %v41, 124
    %v1064 = vpop.permute.xlu0 %1063
    %1065 = vrot.lane.b32.xlu0 %v42, 124
    %v1066 = vpop.permute.xlu0 %1065
    %1067 = vrot.lane.b32.xlu0 %v43, 124
    %v1068 = vpop.permute.xlu0 %1067
    %1069 = vrot.lane.b32.xlu0 %v44, 124
    %v1070 = vpop.permute.xlu0 %1069
    %1071 = vrot.lane.b32.xlu0 %v45, 124
    %v1072 = vpop.permute.xlu0 %1071
    %1073 = vrot.lane.b32.xlu0 %v46, 124
    %v1074 = vpop.permute.xlu0 %1073
    %1075 = vrot.lane.b32.xlu0 %v47, 124
    %v1076 = vpop.permute.xlu0 %1075
    %1077 = vrot.lane.b32.xlu0 %v48, 124
    %v1078 = vpop.permute.xlu0 %1077
    %1079 = vrot.lane.b32.xlu0 %v49, 124
    %v1080 = vpop.permute.xlu0 %1079
    %1081 = vrot.lane.b32.xlu0 %v50, 124
    %v1082 = vpop.permute.xlu0 %1081
    %1083 = vrot.lane.b32.xlu0 %v51, 124
    %v1084 = vpop.permute.xlu0 %1083
    %1085 = vrot.lane.b32.xlu0 %v52, 124
    %v1086 = vpop.permute.xlu0 %1085
    %1087 = vrot.lane.b32.xlu0 %v53, 124
    %v1088 = vpop.permute.xlu0 %1087
    %1089 = vrot.lane.b32.xlu0 %v54, 124
    %v1090 = vpop.permute.xlu0 %1089
    %1091 = vrot.lane.b32.xlu0 %v55, 124
    %v1092 = vpop.permute.xlu0 %1091
    %1093 = vrot.lane.b32.xlu0 %v56, 124
    %v1094 = vpop.permute.xlu0 %1093
    %1127 = vrot.lane.b32.xlu0 %v25, 4
    %v1128 = vpop.permute.xlu0 %1127
    %1129 = vrot.lane.b32.xlu0 %v26, 4
    %v1130 = vpop.permute.xlu0 %1129
    %1131 = vrot.lane.b32.xlu0 %v27, 4
    %v1132 = vpop.permute.xlu0 %1131
    %1133 = vrot.lane.b32.xlu0 %v28, 4
    %v1134 = vpop.permute.xlu0 %1133
    %1135 = vrot.lane.b32.xlu0 %v29, 4
    %v1136 = vpop.permute.xlu0 %1135
    %1137 = vrot.lane.b32.xlu0 %v30, 4
    %v1138 = vpop.permute.xlu0 %1137
    %1139 = vrot.lane.b32.xlu0 %v31, 4
    %v1140 = vpop.permute.xlu0 %1139
    %1141 = vrot.lane.b32.xlu0 %v32, 4
    %v1142 = vpop.permute.xlu0 %1141
    %1143 = vrot.lane.b32.xlu0 %v33, 4
    %v1144 = vpop.permute.xlu0 %1143
    %1145 = vrot.lane.b32.xlu0 %v34, 4
    %v1146 = vpop.permute.xlu0 %1145
    %1147 = vrot.lane.b32.xlu0 %v35, 4
    %v1148 = vpop.permute.xlu0 %1147
    %1149 = vrot.lane.b32.xlu0 %v36, 4
    %v1150 = vpop.permute.xlu0 %1149
    %1151 = vrot.lane.b32.xlu0 %v37, 4
    %v1152 = vpop.permute.xlu0 %1151
    %1153 = vrot.lane.b32.xlu0 %v38, 4
    %v1154 = vpop.permute.xlu0 %1153
    %1155 = vrot.lane.b32.xlu0 %v39, 4
    %v1156 = vpop.permute.xlu0 %1155
    %1157 = vrot.lane.b32.xlu0 %v40, 4
    %v1158 = vpop.permute.xlu0 %1157
    %1159 = vrot.lane.b32.xlu0 %v41, 4
    %v1160 = vpop.permute.xlu0 %1159
    %1161 = vrot.lane.b32.xlu0 %v42, 4
    %v1162 = vpop.permute.xlu0 %1161
    %1163 = vrot.lane.b32.xlu0 %v43, 4
    %v1164 = vpop.permute.xlu0 %1163
    %1165 = vrot.lane.b32.xlu0 %v44, 4
    %v1166 = vpop.permute.xlu0 %1165
    %1167 = vrot.lane.b32.xlu0 %v45, 4
    %v1168 = vpop.permute.xlu0 %1167
    %1169 = vrot.lane.b32.xlu0 %v46, 4
    %v1170 = vpop.permute.xlu0 %1169
    %1171 = vrot.lane.b32.xlu0 %v47, 4
    %v1172 = vpop.permute.xlu0 %1171
    %1173 = vrot.lane.b32.xlu0 %v48, 4
    %v1174 = vpop.permute.xlu0 %1173
    %1175 = vrot.lane.b32.xlu0 %v49, 4
    %v1176 = vpop.permute.xlu0 %1175
    %1177 = vrot.lane.b32.xlu0 %v50, 4
    %v1178 = vpop.permute.xlu0 %1177
    %1179 = vrot.lane.b32.xlu0 %v51, 4
    %v1180 = vpop.permute.xlu0 %1179
    %1181 = vrot.lane.b32.xlu0 %v52, 4
    %v1182 = vpop.permute.xlu0 %1181
    %1183 = vrot.lane.b32.xlu0 %v53, 4
    %v1184 = vpop.permute.xlu0 %1183
    %1185 = vrot.lane.b32.xlu0 %v54, 4
    %v1186 = vpop.permute.xlu0 %1185
    %1187 = vrot.lane.b32.xlu0 %v55, 4
    %v1188 = vpop.permute.xlu0 %1187
    %1189 = vrot.lane.b32.xlu0 %v56, 4
    %v1190 = vpop.permute.xlu0 %1189
    %1223 = vrot.lane.b32.xlu0 %v25, 8
    %v1224 = vpop.permute.xlu0 %1223
    %1225 = vrot.lane.b32.xlu0 %v26, 8
    %v1226 = vpop.permute.xlu0 %1225
    %1227 = vrot.lane.b32.xlu0 %v27, 8
    %v1228 = vpop.permute.xlu0 %1227
    %1229 = vrot.lane.b32.xlu0 %v28, 8
    %v1230 = vpop.permute.xlu0 %1229
    %1231 = vrot.lane.b32.xlu0 %v29, 8
    %v1232 = vpop.permute.xlu0 %1231
    %1233 = vrot.lane.b32.xlu0 %v30, 8
    %v1234 = vpop.permute.xlu0 %1233
    %1235 = vrot.lane.b32.xlu0 %v31, 8
    %v1236 = vpop.permute.xlu0 %1235
    %1237 = vrot.lane.b32.xlu0 %v32, 8
    %v1238 = vpop.permute.xlu0 %1237
    %1239 = vrot.lane.b32.xlu0 %v33, 8
    %v1240 = vpop.permute.xlu0 %1239
    %1241 = vrot.lane.b32.xlu0 %v34, 8
    %v1242 = vpop.permute.xlu0 %1241
    %1243 = vrot.lane.b32.xlu0 %v35, 8
    %v1244 = vpop.permute.xlu0 %1243
    %1245 = vrot.lane.b32.xlu0 %v36, 8
    %v1246 = vpop.permute.xlu0 %1245
    %1247 = vrot.lane.b32.xlu0 %v37, 8
    %v1248 = vpop.permute.xlu0 %1247
    %1249 = vrot.lane.b32.xlu0 %v38, 8
    %v1250 = vpop.permute.xlu0 %1249
    %1251 = vrot.lane.b32.xlu0 %v39, 8
    %v1252 = vpop.permute.xlu0 %1251
    %1253 = vrot.lane.b32.xlu0 %v40, 8
    %v1254 = vpop.permute.xlu0 %1253
    %1255 = vrot.lane.b32.xlu0 %v41, 8
    %v1256 = vpop.permute.xlu0 %1255
    %1257 = vrot.lane.b32.xlu0 %v42, 8
    %v1258 = vpop.permute.xlu0 %1257
    %1259 = vrot.lane.b32.xlu0 %v43, 8
    %v1260 = vpop.permute.xlu0 %1259
    %1261 = vrot.lane.b32.xlu0 %v44, 8
    %v1262 = vpop.permute.xlu0 %1261
    %1263 = vrot.lane.b32.xlu0 %v45, 8
    %v1264 = vpop.permute.xlu0 %1263
    %1265 = vrot.lane.b32.xlu0 %v46, 8
    %v1266 = vpop.permute.xlu0 %1265
    %1267 = vrot.lane.b32.xlu0 %v47, 8
    %v1268 = vpop.permute.xlu0 %1267
    %1269 = vrot.lane.b32.xlu0 %v48, 8
    %v1270 = vpop.permute.xlu0 %1269
    %1271 = vrot.lane.b32.xlu0 %v49, 8
    %v1272 = vpop.permute.xlu0 %1271
    %1273 = vrot.lane.b32.xlu0 %v50, 8
    %v1274 = vpop.permute.xlu0 %1273
    %1275 = vrot.lane.b32.xlu0 %v51, 8
    %v1276 = vpop.permute.xlu0 %1275
    %1277 = vrot.lane.b32.xlu0 %v52, 8
    %v1278 = vpop.permute.xlu0 %1277
    %1279 = vrot.lane.b32.xlu0 %v53, 8
    %v1280 = vpop.permute.xlu0 %1279
    %1281 = vrot.lane.b32.xlu0 %v54, 8
    %v1282 = vpop.permute.xlu0 %1281
    %1283 = vrot.lane.b32.xlu0 %v55, 8
    %v1284 = vpop.permute.xlu0 %1283
    %1285 = vrot.lane.b32.xlu0 %v56, 8
    %v1286 = vpop.permute.xlu0 %1285
    %1319 = vrot.lane.b32.xlu0 %v25, 12
    %v1320 = vpop.permute.xlu0 %1319
    %1321 = vrot.lane.b32.xlu0 %v26, 12
    %v1322 = vpop.permute.xlu0 %1321
    %1323 = vrot.lane.b32.xlu0 %v27, 12
    %v1324 = vpop.permute.xlu0 %1323
    %1325 = vrot.lane.b32.xlu0 %v28, 12
    %v1326 = vpop.permute.xlu0 %1325
    %1327 = vrot.lane.b32.xlu0 %v29, 12
    %v1328 = vpop.permute.xlu0 %1327
    %1329 = vrot.lane.b32.xlu0 %v30, 12
    %v1330 = vpop.permute.xlu0 %1329
    %1331 = vrot.lane.b32.xlu0 %v31, 12
    %v1332 = vpop.permute.xlu0 %1331
    %1333 = vrot.lane.b32.xlu0 %v32, 12
    %v1334 = vpop.permute.xlu0 %1333
    %1335 = vrot.lane.b32.xlu0 %v33, 12
    %v1336 = vpop.permute.xlu0 %1335
    %1337 = vrot.lane.b32.xlu0 %v34, 12
    %v1338 = vpop.permute.xlu0 %1337
    %1339 = vrot.lane.b32.xlu0 %v35, 12
    %v1340 = vpop.permute.xlu0 %1339
    %1341 = vrot.lane.b32.xlu0 %v36, 12
    %v1342 = vpop.permute.xlu0 %1341
    %1343 = vrot.lane.b32.xlu0 %v37, 12
    %v1344 = vpop.permute.xlu0 %1343
    %1345 = vrot.lane.b32.xlu0 %v38, 12
    %v1346 = vpop.permute.xlu0 %1345
    %1347 = vrot.lane.b32.xlu0 %v39, 12
    %v1348 = vpop.permute.xlu0 %1347
    %1349 = vrot.lane.b32.xlu0 %v40, 12
    %v1350 = vpop.permute.xlu0 %1349
    %1351 = vrot.lane.b32.xlu0 %v41, 12
    %v1352 = vpop.permute.xlu0 %1351
    %1353 = vrot.lane.b32.xlu0 %v42, 12
    %v1354 = vpop.permute.xlu0 %1353
    %1355 = vrot.lane.b32.xlu0 %v43, 12
    %v1356 = vpop.permute.xlu0 %1355
    %1357 = vrot.lane.b32.xlu0 %v44, 12
    %v1358 = vpop.permute.xlu0 %1357
    %1359 = vrot.lane.b32.xlu0 %v45, 12
    %v1360 = vpop.permute.xlu0 %1359
    %1361 = vrot.lane.b32.xlu0 %v46, 12
    %v1362 = vpop.permute.xlu0 %1361
    %1363 = vrot.lane.b32.xlu0 %v47, 12
    %v1364 = vpop.permute.xlu0 %1363
    %1365 = vrot.lane.b32.xlu0 %v48, 12
    %v1366 = vpop.permute.xlu0 %1365
    %1367 = vrot.lane.b32.xlu0 %v49, 12
    %v1368 = vpop.permute.xlu0 %1367
    %1369 = vrot.lane.b32.xlu0 %v50, 12
    %v1370 = vpop.permute.xlu0 %1369
    %1371 = vrot.lane.b32.xlu0 %v51, 12
    %v1372 = vpop.permute.xlu0 %1371
    %1373 = vrot.lane.b32.xlu0 %v52, 12
    %v1374 = vpop.permute.xlu0 %1373
    %1375 = vrot.lane.b32.xlu0 %v53, 12
    %v1376 = vpop.permute.xlu0 %1375
    %1377 = vrot.lane.b32.xlu0 %v54, 12
    %v1378 = vpop.permute.xlu0 %1377
    %1379 = vrot.lane.b32.xlu0 %v55, 12
    %v1380 = vpop.permute.xlu0 %1379
    %1381 = vrot.lane.b32.xlu0 %v56, 12
    %v1382 = vpop.permute.xlu0 %1381
    %vm1415 = vcmask 31744
    %v1416 = vsel %vm1415, %v936, %v1032
    %v1417 = vsel %vm1415, %v938, %v1034
    %v1418 = vsel %vm1415, %v940, %v1036
    %v1419 = vsel %vm1415, %v942, %v1038
    %v1420 = vsel %vm1415, %v944, %v1040
    %v1421 = vsel %vm1415, %v946, %v1042
    %v1422 = vsel %vm1415, %v948, %v1044
    %v1423 = vsel %vm1415, %v950, %v1046
    %v1424 = vsel %vm1415, %v952, %v1048
    %v1425 = vsel %vm1415, %v954, %v1050
    %v1426 = vsel %vm1415, %v956, %v1052
    %v1427 = vsel %vm1415, %v958, %v1054
    %v1428 = vsel %vm1415, %v960, %v1056
    %v1429 = vsel %vm1415, %v962, %v1058
    %v1430 = vsel %vm1415, %v964, %v1060
    %v1431 = vsel %vm1415, %v966, %v1062
    %v1432 = vsel %vm1415, %v968, %v1064
    %v1433 = vsel %vm1415, %v970, %v1066
    %v1434 = vsel %vm1415, %v972, %v1068
    %v1435 = vsel %vm1415, %v974, %v1070
    %v1436 = vsel %vm1415, %v976, %v1072
    %v1437 = vsel %vm1415, %v978, %v1074
    %v1438 = vsel %vm1415, %v980, %v1076
    %v1439 = vsel %vm1415, %v982, %v1078
    %v1440 = vsel %vm1415, %v984, %v1080
    %v1441 = vsel %vm1415, %v986, %v1082
    %v1442 = vsel %vm1415, %v988, %v1084
    %v1443 = vsel %vm1415, %v990, %v1086
    %v1444 = vsel %vm1415, %v992, %v1088
    %v1445 = vsel %vm1415, %v994, %v1090
    %v1446 = vsel %vm1415, %v996, %v1092
    %v1447 = vsel %vm1415, %v998, %v1094
    %vm1448 = vcmask 64512
    %v1449 = vsel %vm1448, %v1416, %v25
    %v1450 = vsel %vm1448, %v1417, %v26
    %v1451 = vsel %vm1448, %v1418, %v27
    %v1452 = vsel %vm1448, %v1419, %v28
    %v1453 = vsel %vm1448, %v1420, %v29
    %v1454 = vsel %vm1448, %v1421, %v30
    %v1455 = vsel %vm1448, %v1422, %v31
    %v1456 = vsel %vm1448, %v1423, %v32
    %v1457 = vsel %vm1448, %v1424, %v33
    %v1458 = vsel %vm1448, %v1425, %v34
    %v1459 = vsel %vm1448, %v1426, %v35
    %v1460 = vsel %vm1448, %v1427, %v36
    %v1461 = vsel %vm1448, %v1428, %v37
    %v1462 = vsel %vm1448, %v1429, %v38
    %v1463 = vsel %vm1448, %v1430, %v39
    %v1464 = vsel %vm1448, %v1431, %v40
    %v1465 = vsel %vm1448, %v1432, %v41
    %v1466 = vsel %vm1448, %v1433, %v42
    %v1467 = vsel %vm1448, %v1434, %v43
    %v1468 = vsel %vm1448, %v1435, %v44
    %v1469 = vsel %vm1448, %v1436, %v45
    %v1470 = vsel %vm1448, %v1437, %v46
    %v1471 = vsel %vm1448, %v1438, %v47
    %v1472 = vsel %vm1448, %v1439, %v48
    %v1473 = vsel %vm1448, %v1440, %v49
    %v1474 = vsel %vm1448, %v1441, %v50
    %v1475 = vsel %vm1448, %v1442, %v51
    %v1476 = vsel %vm1448, %v1443, %v52
    %v1477 = vsel %vm1448, %v1444, %v53
    %v1478 = vsel %vm1448, %v1445, %v54
    %v1479 = vsel %vm1448, %v1446, %v55
    %v1480 = vsel %vm1448, %v1447, %v56
    %vm1481 = vcmask 97280
    %v1482 = vsel %vm1481, %v1449, %v1128
    %v1483 = vsel %vm1481, %v1450, %v1130
    %v1484 = vsel %vm1481, %v1451, %v1132
    %v1485 = vsel %vm1481, %v1452, %v1134
    %v1486 = vsel %vm1481, %v1453, %v1136
    %v1487 = vsel %vm1481, %v1454, %v1138
    %v1488 = vsel %vm1481, %v1455, %v1140
    %v1489 = vsel %vm1481, %v1456, %v1142
    %v1490 = vsel %vm1481, %v1457, %v1144
    %v1491 = vsel %vm1481, %v1458, %v1146
    %v1492 = vsel %vm1481, %v1459, %v1148
    %v1493 = vsel %vm1481, %v1460, %v1150
    %v1494 = vsel %vm1481, %v1461, %v1152
    %v1495 = vsel %vm1481, %v1462, %v1154
    %v1496 = vsel %vm1481, %v1463, %v1156
    %v1497 = vsel %vm1481, %v1464, %v1158
    %v1498 = vsel %vm1481, %v1465, %v1160
    %v1499 = vsel %vm1481, %v1466, %v1162
    %v1500 = vsel %vm1481, %v1467, %v1164
    %v1501 = vsel %vm1481, %v1468, %v1166
    %v1502 = vsel %vm1481, %v1469, %v1168
    %v1503 = vsel %vm1481, %v1470, %v1170
    %v1504 = vsel %vm1481, %v1471, %v1172
    %v1505 = vsel %vm1481, %v1472, %v1174
    %v1506 = vsel %vm1481, %v1473, %v1176
    %v1507 = vsel %vm1481, %v1474, %v1178
    %v1508 = vsel %vm1481, %v1475, %v1180
    %v1509 = vsel %vm1481, %v1476, %v1182
    %v1510 = vsel %vm1481, %v1477, %v1184
    %v1511 = vsel %vm1481, %v1478, %v1186
    %v1512 = vsel %vm1481, %v1479, %v1188
    %v1513 = vsel %vm1481, %v1480, %v1190
    %vm1514 = vcmask 130048
    %v1515 = vsel %vm1514, %v1482, %v1224
    %v1516 = vsel %vm1514, %v1483, %v1226
    %v1517 = vsel %vm1514, %v1484, %v1228
    %v1518 = vsel %vm1514, %v1485, %v1230
    %v1519 = vsel %vm1514, %v1486, %v1232
    %v1520 = vsel %vm1514, %v1487, %v1234
    %v1521 = vsel %vm1514, %v1488, %v1236
    %v1522 = vsel %vm1514, %v1489, %v1238
    %v1523 = vsel %vm1514, %v1490, %v1240
    %v1524 = vsel %vm1514, %v1491, %v1242
    %v1525 = vsel %vm1514, %v1492, %v1244
    %v1526 = vsel %vm1514, %v1493, %v1246
    %v1527 = vsel %vm1514, %v1494, %v1248
    %v1528 = vsel %vm1514, %v1495, %v1250
    %v1529 = vsel %vm1514, %v1496, %v1252
    %v1530 = vsel %vm1514, %v1497, %v1254
    %v1531 = vsel %vm1514, %v1498, %v1256
    %v1532 = vsel %vm1514, %v1499, %v1258
    %v1533 = vsel %vm1514, %v1500, %v1260
    %v1534 = vsel %vm1514, %v1501, %v1262
    %v1535 = vsel %vm1514, %v1502, %v1264
    %v1536 = vsel %vm1514, %v1503, %v1266
    %v1537 = vsel %vm1514, %v1504, %v1268
    %v1538 = vsel %vm1514, %v1505, %v1270
    %v1539 = vsel %vm1514, %v1506, %v1272
    %v1540 = vsel %vm1514, %v1507, %v1274
    %v1541 = vsel %vm1514, %v1508, %v1276
    %v1542 = vsel %vm1514, %v1509, %v1278
    %v1543 = vsel %vm1514, %v1510, %v1280
    %v1544 = vsel %vm1514, %v1511, %v1282
    %v1545 = vsel %vm1514, %v1512, %v1284
    %v1546 = vsel %vm1514, %v1513, %v1286
    %vm1547 = vcmask 162816
    %v1548 = vsel %vm1547, %v1515, %v1320
    %v1549 = vsel %vm1547, %v1516, %v1322
    %v1550 = vsel %vm1547, %v1517, %v1324
    %v1551 = vsel %vm1547, %v1518, %v1326
    %v1552 = vsel %vm1547, %v1519, %v1328
    %v1553 = vsel %vm1547, %v1520, %v1330
    %v1554 = vsel %vm1547, %v1521, %v1332
    %v1555 = vsel %vm1547, %v1522, %v1334
    %v1556 = vsel %vm1547, %v1523, %v1336
    %v1557 = vsel %vm1547, %v1524, %v1338
    %v1558 = vsel %vm1547, %v1525, %v1340
    %v1559 = vsel %vm1547, %v1526, %v1342
    %v1560 = vsel %vm1547, %v1527, %v1344
    %v1561 = vsel %vm1547, %v1528, %v1346
    %v1562 = vsel %vm1547, %v1529, %v1348
    %v1563 = vsel %vm1547, %v1530, %v1350
    %v1564 = vsel %vm1547, %v1531, %v1352
    %v1565 = vsel %vm1547, %v1532, %v1354
    %v1566 = vsel %vm1547, %v1533, %v1356
    %v1567 = vsel %vm1547, %v1534, %v1358
    %v1568 = vsel %vm1547, %v1535, %v1360
    %v1569 = vsel %vm1547, %v1536, %v1362
    %v1570 = vsel %vm1547, %v1537, %v1364
    %v1571 = vsel %vm1547, %v1538, %v1366
    %v1572 = vsel %vm1547, %v1539, %v1368
    %v1573 = vsel %vm1547, %v1540, %v1370
    %v1574 = vsel %vm1547, %v1541, %v1372
    %v1575 = vsel %vm1547, %v1542, %v1374
    %v1576 = vsel %vm1547, %v1543, %v1376
    %v1577 = vsel %vm1547, %v1544, %v1378
    %v1578 = vsel %vm1547, %v1545, %v1380
    %v1579 = vsel %vm1547, %v1546, %v1382
    %1612 = vrot.lane.b32.xlu0 %v1548, 32
    %v1613 = vpop.permute.xlu0 %1612
    %1614 = vrot.lane.b32.xlu0 %v1549, 32
    %v1615 = vpop.permute.xlu0 %1614
    %1616 = vrot.lane.b32.xlu0 %v1550, 32
    %v1617 = vpop.permute.xlu0 %1616
    %1618 = vrot.lane.b32.xlu0 %v1551, 32
    %v1619 = vpop.permute.xlu0 %1618
    %1620 = vrot.lane.b32.xlu0 %v1552, 32
    %v1621 = vpop.permute.xlu0 %1620
    %1622 = vrot.lane.b32.xlu0 %v1553, 32
    %v1623 = vpop.permute.xlu0 %1622
    %1624 = vrot.lane.b32.xlu0 %v1554, 32
    %v1625 = vpop.permute.xlu0 %1624
    %1626 = vrot.lane.b32.xlu0 %v1555, 32
    %v1627 = vpop.permute.xlu0 %1626
    %1628 = vrot.lane.b32.xlu0 %v1556, 32
    %v1629 = vpop.permute.xlu0 %1628
    %1630 = vrot.lane.b32.xlu0 %v1557, 32
    %v1631 = vpop.permute.xlu0 %1630
    %1632 = vrot.lane.b32.xlu0 %v1558, 32
    %v1633 = vpop.permute.xlu0 %1632
    %1634 = vrot.lane.b32.xlu0 %v1559, 32
    %v1635 = vpop.permute.xlu0 %1634
    %1636 = vrot.lane.b32.xlu0 %v1560, 32
    %v1637 = vpop.permute.xlu0 %1636
    %1638 = vrot.lane.b32.xlu0 %v1561, 32
    %v1639 = vpop.permute.xlu0 %1638
    %1640 = vrot.lane.b32.xlu0 %v1562, 32
    %v1641 = vpop.permute.xlu0 %1640
    %1642 = vrot.lane.b32.xlu0 %v1563, 32
    %v1643 = vpop.permute.xlu0 %1642
    %1644 = vrot.lane.b32.xlu0 %v1564, 32
    %v1645 = vpop.permute.xlu0 %1644
    %1646 = vrot.lane.b32.xlu0 %v1565, 32
    %v1647 = vpop.permute.xlu0 %1646
    %1648 = vrot.lane.b32.xlu0 %v1566, 32
    %v1649 = vpop.permute.xlu0 %1648
    %1650 = vrot.lane.b32.xlu0 %v1567, 32
    %v1651 = vpop.permute.xlu0 %1650
    %1652 = vrot.lane.b32.xlu0 %v1568, 32
    %v1653 = vpop.permute.xlu0 %1652
    %1654 = vrot.lane.b32.xlu0 %v1569, 32
    %v1655 = vpop.permute.xlu0 %1654
    %1656 = vrot.lane.b32.xlu0 %v1570, 32
    %v1657 = vpop.permute.xlu0 %1656
    %1658 = vrot.lane.b32.xlu0 %v1571, 32
    %v1659 = vpop.permute.xlu0 %1658
    %1660 = vrot.lane.b32.xlu0 %v1572, 32
    %v1661 = vpop.permute.xlu0 %1660
    %1662 = vrot.lane.b32.xlu0 %v1573, 32
    %v1663 = vpop.permute.xlu0 %1662
    %1664 = vrot.lane.b32.xlu0 %v1574, 32
    %v1665 = vpop.permute.xlu0 %1664
    %1666 = vrot.lane.b32.xlu0 %v1575, 32
    %v1667 = vpop.permute.xlu0 %1666
    %1668 = vrot.lane.b32.xlu0 %v1576, 32
    %v1669 = vpop.permute.xlu0 %1668
    %1670 = vrot.lane.b32.xlu0 %v1577, 32
    %v1671 = vpop.permute.xlu0 %1670
    %1672 = vrot.lane.b32.xlu0 %v1578, 32
    %v1673 = vpop.permute.xlu0 %1672
    %1674 = vrot.lane.b32.xlu0 %v1579, 32
    %v1675 = vpop.permute.xlu0 %1674
    %v1708 = vmul.f32 %v238, %v1613
    %v1709 = vmul.f32 %v243, %v1615
    %v1710 = vmul.f32 %v248, %v1617
    %v1711 = vmul.f32 %v253, %v1619
    %v1712 = vmul.f32 %v258, %v1621
    %v1713 = vmul.f32 %v263, %v1623
    %v1714 = vmul.f32 %v268, %v1625
    %v1715 = vmul.f32 %v273, %v1627
    %v1716 = vmul.f32 %v278, %v1629
    %v1717 = vmul.f32 %v283, %v1631
    %v1718 = vmul.f32 %v288, %v1633
    %v1719 = vmul.f32 %v293, %v1635
    %v1720 = vmul.f32 %v298, %v1637
    %v1721 = vmul.f32 %v303, %v1639
    %v1722 = vmul.f32 %v308, %v1641
    %v1723 = vmul.f32 %v313, %v1643
    %v1724 = vmul.f32 %v318, %v1645
    %v1725 = vmul.f32 %v323, %v1647
    %v1726 = vmul.f32 %v328, %v1649
    %v1727 = vmul.f32 %v333, %v1651
    %v1728 = vmul.f32 %v338, %v1653
    %v1729 = vmul.f32 %v343, %v1655
    %v1730 = vmul.f32 %v348, %v1657
    %v1731 = vmul.f32 %v353, %v1659
    %v1732 = vmul.f32 %v358, %v1661
    %v1733 = vmul.f32 %v363, %v1663
    %v1734 = vmul.f32 %v368, %v1665
    %v1735 = vmul.f32 %v373, %v1667
    %v1736 = vmul.f32 %v378, %v1669
    %v1737 = vmul.f32 %v383, %v1671
    %v1738 = vmul.f32 %v388, %v1673
    %v1739 = vmul.f32 %v393, %v1675
    %1772 = vrot.lane.b32.xlu0 %v1708, 96
    %v1773 = vpop.permute.xlu0 %1772
    %1774 = vrot.lane.b32.xlu0 %v1709, 96
    %v1775 = vpop.permute.xlu0 %1774
    %1776 = vrot.lane.b32.xlu0 %v1710, 96
    %v1777 = vpop.permute.xlu0 %1776
    %1778 = vrot.lane.b32.xlu0 %v1711, 96
    %v1779 = vpop.permute.xlu0 %1778
    %1780 = vrot.lane.b32.xlu0 %v1712, 96
    %v1781 = vpop.permute.xlu0 %1780
    %1782 = vrot.lane.b32.xlu0 %v1713, 96
    %v1783 = vpop.permute.xlu0 %1782
    %1784 = vrot.lane.b32.xlu0 %v1714, 96
    %v1785 = vpop.permute.xlu0 %1784
    %1786 = vrot.lane.b32.xlu0 %v1715, 96
    %v1787 = vpop.permute.xlu0 %1786
    %1788 = vrot.lane.b32.xlu0 %v1716, 96
    %v1789 = vpop.permute.xlu0 %1788
    %1790 = vrot.lane.b32.xlu0 %v1717, 96
    %v1791 = vpop.permute.xlu0 %1790
    %1792 = vrot.lane.b32.xlu0 %v1718, 96
    %v1793 = vpop.permute.xlu0 %1792
    %1794 = vrot.lane.b32.xlu0 %v1719, 96
    %v1795 = vpop.permute.xlu0 %1794
    %1796 = vrot.lane.b32.xlu0 %v1720, 96
    %v1797 = vpop.permute.xlu0 %1796
    %1798 = vrot.lane.b32.xlu0 %v1721, 96
    %v1799 = vpop.permute.xlu0 %1798
    %1800 = vrot.lane.b32.xlu0 %v1722, 96
    %v1801 = vpop.permute.xlu0 %1800
    %1802 = vrot.lane.b32.xlu0 %v1723, 96
    %v1803 = vpop.permute.xlu0 %1802
    %1804 = vrot.lane.b32.xlu0 %v1724, 96
    %v1805 = vpop.permute.xlu0 %1804
    %1806 = vrot.lane.b32.xlu0 %v1725, 96
    %v1807 = vpop.permute.xlu0 %1806
    %1808 = vrot.lane.b32.xlu0 %v1726, 96
    %v1809 = vpop.permute.xlu0 %1808
    %1810 = vrot.lane.b32.xlu0 %v1727, 96
    %v1811 = vpop.permute.xlu0 %1810
    %1812 = vrot.lane.b32.xlu0 %v1728, 96
    %v1813 = vpop.permute.xlu0 %1812
    %1814 = vrot.lane.b32.xlu0 %v1729, 96
    %v1815 = vpop.permute.xlu0 %1814
    %1816 = vrot.lane.b32.xlu0 %v1730, 96
    %v1817 = vpop.permute.xlu0 %1816
    %1818 = vrot.lane.b32.xlu0 %v1731, 96
    %v1819 = vpop.permute.xlu0 %1818
    %1820 = vrot.lane.b32.xlu0 %v1732, 96
    %v1821 = vpop.permute.xlu0 %1820
    %1822 = vrot.lane.b32.xlu0 %v1733, 96
    %v1823 = vpop.permute.xlu0 %1822
    %1824 = vrot.lane.b32.xlu0 %v1734, 96
    %v1825 = vpop.permute.xlu0 %1824
    %1826 = vrot.lane.b32.xlu0 %v1735, 96
    %v1827 = vpop.permute.xlu0 %1826
    %1828 = vrot.lane.b32.xlu0 %v1736, 96
    %v1829 = vpop.permute.xlu0 %1828
    %1830 = vrot.lane.b32.xlu0 %v1737, 96
    %v1831 = vpop.permute.xlu0 %1830
    %1832 = vrot.lane.b32.xlu0 %v1738, 96
    %v1833 = vpop.permute.xlu0 %1832
    %1834 = vrot.lane.b32.xlu0 %v1739, 96
    %v1835 = vpop.permute.xlu0 %1834
    %1900 = vrot.lane.b32.xlu0 %v903, 24
    %v1901 = vpop.permute.xlu0 %1900
    %1902 = vrot.lane.b32.xlu0 %v904, 24
    %v1903 = vpop.permute.xlu0 %1902
    %1904 = vrot.lane.b32.xlu0 %v905, 24
    %v1905 = vpop.permute.xlu0 %1904
    %1906 = vrot.lane.b32.xlu0 %v906, 24
    %v1907 = vpop.permute.xlu0 %1906
    %1908 = vrot.lane.b32.xlu0 %v907, 24
    %v1909 = vpop.permute.xlu0 %1908
    %1910 = vrot.lane.b32.xlu0 %v908, 24
    %v1911 = vpop.permute.xlu0 %1910
    %1912 = vrot.lane.b32.xlu0 %v909, 24
    %v1913 = vpop.permute.xlu0 %1912
    %1914 = vrot.lane.b32.xlu0 %v910, 24
    %v1915 = vpop.permute.xlu0 %1914
    %1916 = vrot.lane.b32.xlu0 %v911, 24
    %v1917 = vpop.permute.xlu0 %1916
    %1918 = vrot.lane.b32.xlu0 %v912, 24
    %v1919 = vpop.permute.xlu0 %1918
    %1920 = vrot.lane.b32.xlu0 %v913, 24
    %v1921 = vpop.permute.xlu0 %1920
    %1922 = vrot.lane.b32.xlu0 %v914, 24
    %v1923 = vpop.permute.xlu0 %1922
    %1924 = vrot.lane.b32.xlu0 %v915, 24
    %v1925 = vpop.permute.xlu0 %1924
    %1926 = vrot.lane.b32.xlu0 %v916, 24
    %v1927 = vpop.permute.xlu0 %1926
    %1928 = vrot.lane.b32.xlu0 %v917, 24
    %v1929 = vpop.permute.xlu0 %1928
    %1930 = vrot.lane.b32.xlu0 %v918, 24
    %v1931 = vpop.permute.xlu0 %1930
    %1932 = vrot.lane.b32.xlu0 %v919, 24
    %v1933 = vpop.permute.xlu0 %1932
    %1934 = vrot.lane.b32.xlu0 %v920, 24
    %v1935 = vpop.permute.xlu0 %1934
    %1936 = vrot.lane.b32.xlu0 %v921, 24
    %v1937 = vpop.permute.xlu0 %1936
    %1938 = vrot.lane.b32.xlu0 %v922, 24
    %v1939 = vpop.permute.xlu0 %1938
    %1940 = vrot.lane.b32.xlu0 %v923, 24
    %v1941 = vpop.permute.xlu0 %1940
    %1942 = vrot.lane.b32.xlu0 %v924, 24
    %v1943 = vpop.permute.xlu0 %1942
    %1944 = vrot.lane.b32.xlu0 %v925, 24
    %v1945 = vpop.permute.xlu0 %1944
    %1946 = vrot.lane.b32.xlu0 %v926, 24
    %v1947 = vpop.permute.xlu0 %1946
    %1948 = vrot.lane.b32.xlu0 %v927, 24
    %v1949 = vpop.permute.xlu0 %1948
    %1950 = vrot.lane.b32.xlu0 %v928, 24
    %v1951 = vpop.permute.xlu0 %1950
    %1952 = vrot.lane.b32.xlu0 %v929, 24
    %v1953 = vpop.permute.xlu0 %1952
    %1954 = vrot.lane.b32.xlu0 %v930, 24
    %v1955 = vpop.permute.xlu0 %1954
    %1956 = vrot.lane.b32.xlu0 %v931, 24
    %v1957 = vpop.permute.xlu0 %1956
    %1958 = vrot.lane.b32.xlu0 %v932, 24
    %v1959 = vpop.permute.xlu0 %1958
    %1960 = vrot.lane.b32.xlu0 %v933, 24
    %v1961 = vpop.permute.xlu0 %1960
    %1962 = vrot.lane.b32.xlu0 %v934, 24
    %v1963 = vpop.permute.xlu0 %1962
    %1996 = vrot.lane.b32.xlu0 %v25, 44
    %v1997 = vpop.permute.xlu0 %1996
    %1998 = vrot.lane.b32.xlu0 %v26, 44
    %v1999 = vpop.permute.xlu0 %1998
    %2000 = vrot.lane.b32.xlu0 %v27, 44
    %v2001 = vpop.permute.xlu0 %2000
    %2002 = vrot.lane.b32.xlu0 %v28, 44
    %v2003 = vpop.permute.xlu0 %2002
    %2004 = vrot.lane.b32.xlu0 %v29, 44
    %v2005 = vpop.permute.xlu0 %2004
    %2006 = vrot.lane.b32.xlu0 %v30, 44
    %v2007 = vpop.permute.xlu0 %2006
    %2008 = vrot.lane.b32.xlu0 %v31, 44
    %v2009 = vpop.permute.xlu0 %2008
    %2010 = vrot.lane.b32.xlu0 %v32, 44
    %v2011 = vpop.permute.xlu0 %2010
    %2012 = vrot.lane.b32.xlu0 %v33, 44
    %v2013 = vpop.permute.xlu0 %2012
    %2014 = vrot.lane.b32.xlu0 %v34, 44
    %v2015 = vpop.permute.xlu0 %2014
    %2016 = vrot.lane.b32.xlu0 %v35, 44
    %v2017 = vpop.permute.xlu0 %2016
    %2018 = vrot.lane.b32.xlu0 %v36, 44
    %v2019 = vpop.permute.xlu0 %2018
    %2020 = vrot.lane.b32.xlu0 %v37, 44
    %v2021 = vpop.permute.xlu0 %2020
    %2022 = vrot.lane.b32.xlu0 %v38, 44
    %v2023 = vpop.permute.xlu0 %2022
    %2024 = vrot.lane.b32.xlu0 %v39, 44
    %v2025 = vpop.permute.xlu0 %2024
    %2026 = vrot.lane.b32.xlu0 %v40, 44
    %v2027 = vpop.permute.xlu0 %2026
    %2028 = vrot.lane.b32.xlu0 %v41, 44
    %v2029 = vpop.permute.xlu0 %2028
    %2030 = vrot.lane.b32.xlu0 %v42, 44
    %v2031 = vpop.permute.xlu0 %2030
    %2032 = vrot.lane.b32.xlu0 %v43, 44
    %v2033 = vpop.permute.xlu0 %2032
    %2034 = vrot.lane.b32.xlu0 %v44, 44
    %v2035 = vpop.permute.xlu0 %2034
    %2036 = vrot.lane.b32.xlu0 %v45, 44
    %v2037 = vpop.permute.xlu0 %2036
    %2038 = vrot.lane.b32.xlu0 %v46, 44
    %v2039 = vpop.permute.xlu0 %2038
    %2040 = vrot.lane.b32.xlu0 %v47, 44
    %v2041 = vpop.permute.xlu0 %2040
    %2042 = vrot.lane.b32.xlu0 %v48, 44
    %v2043 = vpop.permute.xlu0 %2042
    %2044 = vrot.lane.b32.xlu0 %v49, 44
    %v2045 = vpop.permute.xlu0 %2044
    %2046 = vrot.lane.b32.xlu0 %v50, 44
    %v2047 = vpop.permute.xlu0 %2046
    %2048 = vrot.lane.b32.xlu0 %v51, 44
    %v2049 = vpop.permute.xlu0 %2048
    %2050 = vrot.lane.b32.xlu0 %v52, 44
    %v2051 = vpop.permute.xlu0 %2050
    %2052 = vrot.lane.b32.xlu0 %v53, 44
    %v2053 = vpop.permute.xlu0 %2052
    %2054 = vrot.lane.b32.xlu0 %v54, 44
    %v2055 = vpop.permute.xlu0 %2054
    %2056 = vrot.lane.b32.xlu0 %v55, 44
    %v2057 = vpop.permute.xlu0 %2056
    %2058 = vrot.lane.b32.xlu0 %v56, 44
    %v2059 = vpop.permute.xlu0 %2058
    %vm2092 = vcmask 195584
    %v2093 = vsel %vm2092, %v1773, %v1901
    %v2094 = vsel %vm2092, %v1775, %v1903
    %v2095 = vsel %vm2092, %v1777, %v1905
    %v2096 = vsel %vm2092, %v1779, %v1907
    %v2097 = vsel %vm2092, %v1781, %v1909
    %v2098 = vsel %vm2092, %v1783, %v1911
    %v2099 = vsel %vm2092, %v1785, %v1913
    %v2100 = vsel %vm2092, %v1787, %v1915
    %v2101 = vsel %vm2092, %v1789, %v1917
    %v2102 = vsel %vm2092, %v1791, %v1919
    %v2103 = vsel %vm2092, %v1793, %v1921
    %v2104 = vsel %vm2092, %v1795, %v1923
    %v2105 = vsel %vm2092, %v1797, %v1925
    %v2106 = vsel %vm2092, %v1799, %v1927
    %v2107 = vsel %vm2092, %v1801, %v1929
    %v2108 = vsel %vm2092, %v1803, %v1931
    %v2109 = vsel %vm2092, %v1805, %v1933
    %v2110 = vsel %vm2092, %v1807, %v1935
    %v2111 = vsel %vm2092, %v1809, %v1937
    %v2112 = vsel %vm2092, %v1811, %v1939
    %v2113 = vsel %vm2092, %v1813, %v1941
    %v2114 = vsel %vm2092, %v1815, %v1943
    %v2115 = vsel %vm2092, %v1817, %v1945
    %v2116 = vsel %vm2092, %v1819, %v1947
    %v2117 = vsel %vm2092, %v1821, %v1949
    %v2118 = vsel %vm2092, %v1823, %v1951
    %v2119 = vsel %vm2092, %v1825, %v1953
    %v2120 = vsel %vm2092, %v1827, %v1955
    %v2121 = vsel %vm2092, %v1829, %v1957
    %v2122 = vsel %vm2092, %v1831, %v1959
    %v2123 = vsel %vm2092, %v1833, %v1961
    %v2124 = vsel %vm2092, %v1835, %v1963
    %vm2125 = vcmask 457728
    %v2126 = vsel %vm2125, %v2093, %v1997
    %v2127 = vsel %vm2125, %v2094, %v1999
    %v2128 = vsel %vm2125, %v2095, %v2001
    %v2129 = vsel %vm2125, %v2096, %v2003
    %v2130 = vsel %vm2125, %v2097, %v2005
    %v2131 = vsel %vm2125, %v2098, %v2007
    %v2132 = vsel %vm2125, %v2099, %v2009
    %v2133 = vsel %vm2125, %v2100, %v2011
    %v2134 = vsel %vm2125, %v2101, %v2013
    %v2135 = vsel %vm2125, %v2102, %v2015
    %v2136 = vsel %vm2125, %v2103, %v2017
    %v2137 = vsel %vm2125, %v2104, %v2019
    %v2138 = vsel %vm2125, %v2105, %v2021
    %v2139 = vsel %vm2125, %v2106, %v2023
    %v2140 = vsel %vm2125, %v2107, %v2025
    %v2141 = vsel %vm2125, %v2108, %v2027
    %v2142 = vsel %vm2125, %v2109, %v2029
    %v2143 = vsel %vm2125, %v2110, %v2031
    %v2144 = vsel %vm2125, %v2111, %v2033
    %v2145 = vsel %vm2125, %v2112, %v2035
    %v2146 = vsel %vm2125, %v2113, %v2037
    %v2147 = vsel %vm2125, %v2114, %v2039
    %v2148 = vsel %vm2125, %v2115, %v2041
    %v2149 = vsel %vm2125, %v2116, %v2043
    %v2150 = vsel %vm2125, %v2117, %v2045
    %v2151 = vsel %vm2125, %v2118, %v2047
    %v2152 = vsel %vm2125, %v2119, %v2049
    %v2153 = vsel %vm2125, %v2120, %v2051
    %v2154 = vsel %vm2125, %v2121, %v2053
    %v2155 = vsel %vm2125, %v2122, %v2055
    %v2156 = vsel %vm2125, %v2123, %v2057
    %v2157 = vsel %vm2125, %v2124, %v2059
    %v2158 = vld [vmem:[#allocation2] sm:$0xff]
    %v2159 = vld [vmem:[#allocation2 + $0x8] sm:$0xff]
    %v2160 = vld [vmem:[#allocation2 + $0x10] sm:$0xff]
    %v2161 = vld [vmem:[#allocation2 + $0x18] sm:$0xff]
    %v2162 = vld [vmem:[#allocation2 + $0x20] sm:$0xff]
    %v2163 = vld [vmem:[#allocation2 + $0x28] sm:$0xff]
    %v2164 = vld [vmem:[#allocation2 + $0x30] sm:$0xff]
    %v2165 = vld [vmem:[#allocation2 + $0x38] sm:$0xff]
    %v2166 = vld [vmem:[#allocation2 + $0x40] sm:$0xff]
    %v2167 = vld [vmem:[#allocation2 + $0x48] sm:$0xff]
    %v2168 = vld [vmem:[#allocation2 + $0x50] sm:$0xff]
    %v2169 = vld [vmem:[#allocation2 + $0x58] sm:$0xff]
    %v2170 = vld [vmem:[#allocation2 + $0x60] sm:$0xff]
    %v2171 = vld [vmem:[#allocation2 + $0x68] sm:$0xff]
    %v2172 = vld [vmem:[#allocation2 + $0x70] sm:$0xf]
    %v2173 = vld [vmem:[#allocation2 + $0x78] sm:$0xf]
    %s2174 = scalar_lea.vmem [#allocation2], 116
    %v2175 = vld [vmem:[%s2174] ss:$8 sm:$0x3]
    %v2177 = vlaneseq
    %v2178 = vshrl.u32 %v2177, 7
    %v2179 = vsub.s32 0, %v2178
    %v2180 = vrot.slane %v2175, %v2179
    %v2181 = vlaneseq
    %v2182 = vshrl.u32 %v2181, 7
    %v2183 = vsub.s32 1, %v2182
    %v2184 = vrot.slane %v2175, %v2183
    %vm2187 = vcmask 490496
    %v2189 = vsel %vm2187, %v2126, 0
    %v2192 = vsel %vm2187, %v2127, 0
    %v2195 = vsel %vm2187, %v2128, 0
    %v2198 = vsel %vm2187, %v2129, 0
    %v2201 = vsel %vm2187, %v2130, 0
    %v2204 = vsel %vm2187, %v2131, 0
    %v2207 = vsel %vm2187, %v2132, 0
    %v2210 = vsel %vm2187, %v2133, 0
    %v2213 = vsel %vm2187, %v2134, 0
    %v2216 = vsel %vm2187, %v2135, 0
    %v2219 = vsel %vm2187, %v2136, 0
    %v2222 = vsel %vm2187, %v2137, 0
    %v2225 = vsel %vm2187, %v2138, 0
    %v2228 = vsel %vm2187, %v2139, 0
    %v2231 = vsel %vm2187, %v2140, 0
    %v2234 = vsel %vm2187, %v2141, 0
    %v2237 = vsel %vm2187, %v2142, 0
    %v2240 = vsel %vm2187, %v2143, 0
    %v2243 = vsel %vm2187, %v2144, 0
    %v2246 = vsel %vm2187, %v2145, 0
    %v2249 = vsel %vm2187, %v2146, 0
    %v2252 = vsel %vm2187, %v2147, 0
    %v2255 = vsel %vm2187, %v2148, 0
    %v2258 = vsel %vm2187, %v2149, 0
    %v2261 = vsel %vm2187, %v2150, 0
    %v2264 = vsel %vm2187, %v2151, 0
    %v2267 = vsel %vm2187, %v2152, 0
    %v2270 = vsel %vm2187, %v2153, 0
    %v2273 = vsel %vm2187, %v2154, 0
    %v2276 = vsel %vm2187, %v2155, 0
    %v2279 = vsel %vm2187, %v2156, 0
    %v2282 = vsel %vm2187, %v2157, 0
    %vm2284 = vcmask 1043456
    %v2286 = vsel %vm2284, %v2172, 0
    %v2289 = vsel %vm2284, %v2173, 0
    %2291 = vmatprep.subr.mxu0 0.0
    %2292 = vmatpush1.msra.mxu0 0.0
    %2293 = vmatprep.subr.mxu0 0.0
    %2294 = vmatpush1.msra.mxu0 0.0
    %2295 = vmatprep.subr.mxu0 0.0
    %2296 = vmatpush1.msra.mxu0 0.0
    %2297 = vmatprep.subr.mxu0 0.0
    %2298 = vmatpush1.msra.mxu0 0.0
    %2299 = vmatprep.subr.mxu0 0.0
    %2300 = vmatpush1.msra.mxu0 0.0
    %2301 = vmatprep.subr.mxu0 0.0
    %2302 = vmatpush1.msra.mxu0 0.0
    %2303 = vmatprep.subr.mxu0 0.0
    %2304 = vmatpush1.msra.mxu0 0.0
    %2305 = vmatprep.subr.mxu0 0.0
    %2306 = vmatpush1.msra.mxu0 0.0
    %2307 = vmatprep.subr.mxu0 %v2289
    %2308 = vmatpush1.msra.mxu0 %v2286
    %2309 = vmatprep.subr.mxu0 %v2171
    %2310 = vmatpush1.msra.mxu0 %v2170
    %2311 = vmatprep.subr.mxu0 %v2169
    %2312 = vmatpush1.msra.mxu0 %v2168
    %2313 = vmatprep.subr.mxu0 %v2167
    %2314 = vmatpush1.msra.mxu0 %v2166
    %2315 = vmatprep.subr.mxu0 %v2165
    %2316 = vmatpush1.msra.mxu0 %v2164
    %2317 = vmatprep.subr.mxu0 %v2163
    %2318 = vmatpush1.msra.mxu0 %v2162
    %2319 = vmatprep.subr.mxu0 %v2161
    %2320 = vmatpush1.msra.mxu0 %v2160
    %2321 = vmatprep.subr.mxu0 %v2159
    %2322 = vmatpush1.msra.mxu0 %v2158
    %2323 = vmatprep.subr.mxu0 0.0
    %2324 = vmatpush2.msra.mxu0 0.0
    %2325 = vmatprep.subr.mxu0 0.0
    %2326 = vmatpush2.msra.mxu0 0.0
    %2327 = vmatprep.subr.mxu0 0.0
    %2328 = vmatpush2.msra.mxu0 0.0
    %2329 = vmatprep.subr.mxu0 0.0
    %2330 = vmatpush2.msra.mxu0 0.0
    %2331 = vmatprep.subr.mxu0 0.0
    %2332 = vmatpush2.msra.mxu0 0.0
    %2333 = vmatprep.subr.mxu0 0.0
    %2334 = vmatpush2.msra.mxu0 0.0
    %2335 = vmatprep.subr.mxu0 0.0
    %2336 = vmatpush2.msra.mxu0 0.0
    %2337 = vmatprep.subr.mxu0 0.0
    %2338 = vmatpush2.msra.mxu0 0.0
    %2339 = vmatprep.subr.mxu0 0.0
    %2340 = vmatpush2.msra.mxu0 0.0
    %2341 = vmatprep.subr.mxu0 0.0
    %2342 = vmatpush2.msra.mxu0 0.0
    %2343 = vmatprep.subr.mxu0 0.0
    %2344 = vmatpush2.msra.mxu0 0.0
    %2345 = vmatprep.subr.mxu0 0.0
    %2346 = vmatpush2.msra.mxu0 0.0
    %2347 = vmatprep.subr.mxu0 0.0
    %2348 = vmatpush2.msra.mxu0 0.0
    %2349 = vmatprep.subr.mxu0 0.0
    %2350 = vmatpush2.msra.mxu0 0.0
    %2351 = vmatprep.subr.mxu0 0.0
    %2352 = vmatpush2.msra.mxu0 0.0
    %2353 = vmatprep.subr.mxu0 0.0
    %2354 = vmatpush2.msra.mxu0 0.0
    %2355 = vmatprep.mubr.f32.mxu0 0.0
    %2356 = vmatmul.mubr.f32.gmra.mxu0 %v2189
    %v2357 = vpop.f32.mrf.mxu0
    %v2358 = vadd.f32 %v2180, %v2357
    %v2359 = vpop.f32.mrf.mxu0
    %v2360 = vadd.f32 %v2184, %v2359
    %2361 = vmatprep.mubr.f32.mxu0 0.0
    %2362 = vmatmul.mubr.f32.gmra.mxu0 %v2192
    %v2363 = vpop.f32.mrf.mxu0
    %v2364 = vadd.f32 %v2180, %v2363
    %v2365 = vpop.f32.mrf.mxu0
    %v2366 = vadd.f32 %v2184, %v2365
    %2367 = vmatprep.mubr.f32.mxu0 0.0
    %2368 = vmatmul.mubr.f32.gmra.mxu0 %v2195
    %v2369 = vpop.f32.mrf.mxu0
    %v2370 = vadd.f32 %v2180, %v2369
    %v2371 = vpop.f32.mrf.mxu0
    %v2372 = vadd.f32 %v2184, %v2371
    %2373 = vmatprep.mubr.f32.mxu0 0.0
    %2374 = vmatmul.mubr.f32.gmra.mxu0 %v2198
    %v2375 = vpop.f32.mrf.mxu0
    %v2376 = vadd.f32 %v2180, %v2375
    %v2377 = vpop.f32.mrf.mxu0
    %v2378 = vadd.f32 %v2184, %v2377
    %2379 = vmatprep.mubr.f32.mxu0 0.0
    %2380 = vmatmul.mubr.f32.gmra.mxu0 %v2201
    %v2381 = vpop.f32.mrf.mxu0
    %v2382 = vadd.f32 %v2180, %v2381
    %v2383 = vpop.f32.mrf.mxu0
    %v2384 = vadd.f32 %v2184, %v2383
    %2385 = vmatprep.mubr.f32.mxu0 0.0
    %2386 = vmatmul.mubr.f32.gmra.mxu0 %v2204
    %v2387 = vpop.f32.mrf.mxu0
    %v2388 = vadd.f32 %v2180, %v2387
    %v2389 = vpop.f32.mrf.mxu0
    %v2390 = vadd.f32 %v2184, %v2389
    %2391 = vmatprep.mubr.f32.mxu0 0.0
    %2392 = vmatmul.mubr.f32.gmra.mxu0 %v2207
    %v2393 = vpop.f32.mrf.mxu0
    %v2394 = vadd.f32 %v2180, %v2393
    %v2395 = vpop.f32.mrf.mxu0
    %v2396 = vadd.f32 %v2184, %v2395
    %2397 = vmatprep.mubr.f32.mxu0 0.0
    %2398 = vmatmul.mubr.f32.gmra.mxu0 %v2210
    %v2399 = vpop.f32.mrf.mxu0
    %v2400 = vadd.f32 %v2180, %v2399
    %v2401 = vpop.f32.mrf.mxu0
    %v2402 = vadd.f32 %v2184, %v2401
    %2403 = vmatprep.mubr.f32.mxu0 0.0
    %2404 = vmatmul.mubr.f32.gmra.mxu0 %v2213
    %v2405 = vpop.f32.mrf.mxu0
    %v2406 = vadd.f32 %v2180, %v2405
    %v2407 = vpop.f32.mrf.mxu0
    %v2408 = vadd.f32 %v2184, %v2407
    %2409 = vmatprep.mubr.f32.mxu0 0.0
    %2410 = vmatmul.mubr.f32.gmra.mxu0 %v2216
    %v2411 = vpop.f32.mrf.mxu0
    %v2412 = vadd.f32 %v2180, %v2411
    %v2413 = vpop.f32.mrf.mxu0
    %v2414 = vadd.f32 %v2184, %v2413
    %2415 = vmatprep.mubr.f32.mxu0 0.0
    %2416 = vmatmul.mubr.f32.gmra.mxu0 %v2219
    %v2417 = vpop.f32.mrf.mxu0
    %v2418 = vadd.f32 %v2180, %v2417
    %v2419 = vpop.f32.mrf.mxu0
    %v2420 = vadd.f32 %v2184, %v2419
    %2421 = vmatprep.mubr.f32.mxu0 0.0
    %2422 = vmatmul.mubr.f32.gmra.mxu0 %v2222
    %v2423 = vpop.f32.mrf.mxu0
    %v2424 = vadd.f32 %v2180, %v2423
    %v2425 = vpop.f32.mrf.mxu0
    %v2426 = vadd.f32 %v2184, %v2425
    %2427 = vmatprep.mubr.f32.mxu0 0.0
    %2428 = vmatmul.mubr.f32.gmra.mxu0 %v2225
    %v2429 = vpop.f32.mrf.mxu0
    %v2430 = vadd.f32 %v2180, %v2429
    %v2431 = vpop.f32.mrf.mxu0
    %v2432 = vadd.f32 %v2184, %v2431
    %2433 = vmatprep.mubr.f32.mxu0 0.0
    %2434 = vmatmul.mubr.f32.gmra.mxu0 %v2228
    %v2435 = vpop.f32.mrf.mxu0
    %v2436 = vadd.f32 %v2180, %v2435
    %v2437 = vpop.f32.mrf.mxu0
    %v2438 = vadd.f32 %v2184, %v2437
    %2439 = vmatprep.mubr.f32.mxu0 0.0
    %2440 = vmatmul.mubr.f32.gmra.mxu0 %v2231
    %v2441 = vpop.f32.mrf.mxu0
    %v2442 = vadd.f32 %v2180, %v2441
    %v2443 = vpop.f32.mrf.mxu0
    %v2444 = vadd.f32 %v2184, %v2443
    %2445 = vmatprep.mubr.f32.mxu0 0.0
    %2446 = vmatmul.mubr.f32.gmra.mxu0 %v2234
    %v2447 = vpop.f32.mrf.mxu0
    %v2448 = vadd.f32 %v2180, %v2447
    %v2449 = vpop.f32.mrf.mxu0
    %v2450 = vadd.f32 %v2184, %v2449
    %2451 = vmatprep.mubr.f32.mxu0 0.0
    %2452 = vmatmul.mubr.f32.gmra.mxu0 %v2237
    %v2453 = vpop.f32.mrf.mxu0
    %v2454 = vadd.f32 %v2180, %v2453
    %v2455 = vpop.f32.mrf.mxu0
    %v2456 = vadd.f32 %v2184, %v2455
    %2457 = vmatprep.mubr.f32.mxu0 0.0
    %2458 = vmatmul.mubr.f32.gmra.mxu0 %v2240
    %v2459 = vpop.f32.mrf.mxu0
    %v2460 = vadd.f32 %v2180, %v2459
    %v2461 = vpop.f32.mrf.mxu0
    %v2462 = vadd.f32 %v2184, %v2461
    %2463 = vmatprep.mubr.f32.mxu0 0.0
    %2464 = vmatmul.mubr.f32.gmra.mxu0 %v2243
    %v2465 = vpop.f32.mrf.mxu0
    %v2466 = vadd.f32 %v2180, %v2465
    %v2467 = vpop.f32.mrf.mxu0
    %v2468 = vadd.f32 %v2184, %v2467
    %2469 = vmatprep.mubr.f32.mxu0 0.0
    %2470 = vmatmul.mubr.f32.gmra.mxu0 %v2246
    %v2471 = vpop.f32.mrf.mxu0
    %v2472 = vadd.f32 %v2180, %v2471
    %v2473 = vpop.f32.mrf.mxu0
    %v2474 = vadd.f32 %v2184, %v2473
    %2475 = vmatprep.mubr.f32.mxu0 0.0
    %2476 = vmatmul.mubr.f32.gmra.mxu0 %v2249
    %v2477 = vpop.f32.mrf.mxu0
    %v2478 = vadd.f32 %v2180, %v2477
    %v2479 = vpop.f32.mrf.mxu0
    %v2480 = vadd.f32 %v2184, %v2479
    %2481 = vmatprep.mubr.f32.mxu0 0.0
    %2482 = vmatmul.mubr.f32.gmra.mxu0 %v2252
    %v2483 = vpop.f32.mrf.mxu0
    %v2484 = vadd.f32 %v2180, %v2483
    %v2485 = vpop.f32.mrf.mxu0
    %v2486 = vadd.f32 %v2184, %v2485
    %2487 = vmatprep.mubr.f32.mxu0 0.0
    %2488 = vmatmul.mubr.f32.gmra.mxu0 %v2255
    %v2489 = vpop.f32.mrf.mxu0
    %v2490 = vadd.f32 %v2180, %v2489
    %v2491 = vpop.f32.mrf.mxu0
    %v2492 = vadd.f32 %v2184, %v2491
    %2493 = vmatprep.mubr.f32.mxu0 0.0
    %2494 = vmatmul.mubr.f32.gmra.mxu0 %v2258
    %v2495 = vpop.f32.mrf.mxu0
    %v2496 = vadd.f32 %v2180, %v2495
    %v2497 = vpop.f32.mrf.mxu0
    %v2498 = vadd.f32 %v2184, %v2497
    %2499 = vmatprep.mubr.f32.mxu0 0.0
    %2500 = vmatmul.mubr.f32.gmra.mxu0 %v2261
    %v2501 = vpop.f32.mrf.mxu0
    %v2502 = vadd.f32 %v2180, %v2501
    %v2503 = vpop.f32.mrf.mxu0
    %v2504 = vadd.f32 %v2184, %v2503
    %2505 = vmatprep.mubr.f32.mxu0 0.0
    %2506 = vmatmul.mubr.f32.gmra.mxu0 %v2264
    %v2507 = vpop.f32.mrf.mxu0
    %v2508 = vadd.f32 %v2180, %v2507
    %v2509 = vpop.f32.mrf.mxu0
    %v2510 = vadd.f32 %v2184, %v2509
    %2511 = vmatprep.mubr.f32.mxu0 0.0
    %2512 = vmatmul.mubr.f32.gmra.mxu0 %v2267
    %v2513 = vpop.f32.mrf.mxu0
    %v2514 = vadd.f32 %v2180, %v2513
    %v2515 = vpop.f32.mrf.mxu0
    %v2516 = vadd.f32 %v2184, %v2515
    %2517 = vmatprep.mubr.f32.mxu0 0.0
    %2518 = vmatmul.mubr.f32.gmra.mxu0 %v2270
    %v2519 = vpop.f32.mrf.mxu0
    %v2520 = vadd.f32 %v2180, %v2519
    %v2521 = vpop.f32.mrf.mxu0
    %v2522 = vadd.f32 %v2184, %v2521
    %2523 = vmatprep.mubr.f32.mxu0 0.0
    %2524 = vmatmul.mubr.f32.gmra.mxu0 %v2273
    %v2525 = vpop.f32.mrf.mxu0
    %v2526 = vadd.f32 %v2180, %v2525
    %v2527 = vpop.f32.mrf.mxu0
    %v2528 = vadd.f32 %v2184, %v2527
    %2529 = vmatprep.mubr.f32.mxu0 0.0
    %2530 = vmatmul.mubr.f32.gmra.mxu0 %v2276
    %v2531 = vpop.f32.mrf.mxu0
    %v2532 = vadd.f32 %v2180, %v2531
    %v2533 = vpop.f32.mrf.mxu0
    %v2534 = vadd.f32 %v2184, %v2533
    %2535 = vmatprep.mubr.f32.mxu0 0.0
    %2536 = vmatmul.mubr.f32.gmra.mxu0 %v2279
    %v2537 = vpop.f32.mrf.mxu0
    %v2538 = vadd.f32 %v2180, %v2537
    %v2539 = vpop.f32.mrf.mxu0
    %v2540 = vadd.f32 %v2184, %v2539
    %2541 = vmatprep.mubr.f32.mxu0 0.0
    %2542 = vmatmul.mubr.f32.gmra.mxu0 %v2282
    %v2543 = vpop.f32.mrf.mxu0
    %v2544 = vadd.f32 %v2180, %v2543
    %v2545 = vpop.f32.mrf.mxu0
    %v2546 = vadd.f32 %v2184, %v2545
    %2547 = vdwg.mxu0
    %2548 = vst [vmem:[%s2] sm:$0xff] %v2358
    %2549 = vst.msk [vmem:[%s2 + $0x8] sm:$0xff] %vm517, %v2360
    %2550 = vst [vmem:[%s2 + $0x10] sm:$0xff] %v2364
    %2551 = vst.msk [vmem:[%s2 + $0x18] sm:$0xff] %vm517, %v2366
    %2552 = vst [vmem:[%s2 + $0x20] sm:$0xff] %v2370
    %2553 = vst.msk [vmem:[%s2 + $0x28] sm:$0xff] %vm517, %v2372
    %2554 = vst [vmem:[%s2 + $0x30] sm:$0xff] %v2376
    %2555 = vst.msk [vmem:[%s2 + $0x38] sm:$0xff] %vm517, %v2378
    %2556 = vst [vmem:[%s2 + $0x40] sm:$0xff] %v2382
    %2557 = vst.msk [vmem:[%s2 + $0x48] sm:$0xff] %vm517, %v2384
    %2558 = vst [vmem:[%s2 + $0x50] sm:$0xff] %v2388
    %2559 = vst.msk [vmem:[%s2 + $0x58] sm:$0xff] %vm517, %v2390
    %2560 = vst [vmem:[%s2 + $0x60] sm:$0xff] %v2394
    %2561 = vst.msk [vmem:[%s2 + $0x68] sm:$0xff] %vm517, %v2396
    %2562 = vst [vmem:[%s2 + $0x70] sm:$0xff] %v2400
    %2563 = vst.msk [vmem:[%s2 + $0x78] sm:$0xff] %vm517, %v2402
    %2564 = vst [vmem:[%s2 + $0x80] sm:$0xff] %v2406
    %2565 = vst.msk [vmem:[%s2 + $0x88] sm:$0xff] %vm517, %v2408
    %2566 = vst [vmem:[%s2 + $0x90] sm:$0xff] %v2412
    %2567 = vst.msk [vmem:[%s2 + $0x98] sm:$0xff] %vm517, %v2414
    %2568 = vst [vmem:[%s2 + $0xa0] sm:$0xff] %v2418
    %2569 = vst.msk [vmem:[%s2 + $0xa8] sm:$0xff] %vm517, %v2420
    %2570 = vst [vmem:[%s2 + $0xb0] sm:$0xff] %v2424
    %2571 = vst.msk [vmem:[%s2 + $0xb8] sm:$0xff] %vm517, %v2426
    %2572 = vst [vmem:[%s2 + $0xc0] sm:$0xff] %v2430
    %2573 = vst.msk [vmem:[%s2 + $0xc8] sm:$0xff] %vm517, %v2432
    %2574 = vst [vmem:[%s2 + $0xd0] sm:$0xff] %v2436
    %2575 = vst.msk [vmem:[%s2 + $0xd8] sm:$0xff] %vm517, %v2438
    %2576 = vst [vmem:[%s2 + $0xe0] sm:$0xff] %v2442
    %2577 = vst.msk [vmem:[%s2 + $0xe8] sm:$0xff] %vm517, %v2444
    %2578 = vst [vmem:[%s2 + $0xf0] sm:$0xff] %v2448
    %2579 = vst.msk [vmem:[%s2 + $0xf8] sm:$0xff] %vm517, %v2450
    %2580 = vst [vmem:[%s2 + $0x100] sm:$0xff] %v2454
    %2581 = vst.msk [vmem:[%s2 + $0x108] sm:$0xff] %vm517, %v2456
    %2582 = vst [vmem:[%s2 + $0x110] sm:$0xff] %v2460
    %2583 = vst.msk [vmem:[%s2 + $0x118] sm:$0xff] %vm517, %v2462
    %2584 = vst [vmem:[%s2 + $0x120] sm:$0xff] %v2466
    %2585 = vst.msk [vmem:[%s2 + $0x128] sm:$0xff] %vm517, %v2468
    %2586 = vst [vmem:[%s2 + $0x130] sm:$0xff] %v2472
    %2587 = vst.msk [vmem:[%s2 + $0x138] sm:$0xff] %vm517, %v2474
    %2588 = vst [vmem:[%s2 + $0x140] sm:$0xff] %v2478
    %2589 = vst.msk [vmem:[%s2 + $0x148] sm:$0xff] %vm517, %v2480
    %2590 = vst [vmem:[%s2 + $0x150] sm:$0xff] %v2484
    %2591 = vst.msk [vmem:[%s2 + $0x158] sm:$0xff] %vm517, %v2486
    %2592 = vst [vmem:[%s2 + $0x160] sm:$0xff] %v2490
    %2593 = vst.msk [vmem:[%s2 + $0x168] sm:$0xff] %vm517, %v2492
    %2594 = vst [vmem:[%s2 + $0x170] sm:$0xff] %v2496
    %2595 = vst.msk [vmem:[%s2 + $0x178] sm:$0xff] %vm517, %v2498
    %2596 = vst [vmem:[%s2 + $0x180] sm:$0xff] %v2502
    %2597 = vst.msk [vmem:[%s2 + $0x188] sm:$0xff] %vm517, %v2504
    %2598 = vst [vmem:[%s2 + $0x190] sm:$0xff] %v2508
    %2599 = vst.msk [vmem:[%s2 + $0x198] sm:$0xff] %vm517, %v2510
    %2600 = vst [vmem:[%s2 + $0x1a0] sm:$0xff] %v2514
    %2601 = vst.msk [vmem:[%s2 + $0x1a8] sm:$0xff] %vm517, %v2516
    %2602 = vst [vmem:[%s2 + $0x1b0] sm:$0xff] %v2520
    %2603 = vst.msk [vmem:[%s2 + $0x1b8] sm:$0xff] %vm517, %v2522
    %2604 = vst [vmem:[%s2 + $0x1c0] sm:$0xff] %v2526
    %2605 = vst.msk [vmem:[%s2 + $0x1c8] sm:$0xff] %vm517, %v2528
    %2606 = vst [vmem:[%s2 + $0x1d0] sm:$0xff] %v2532
    %2607 = vst.msk [vmem:[%s2 + $0x1d8] sm:$0xff] %vm517, %v2534
    %2608 = vst [vmem:[%s2 + $0x1e0] sm:$0xff] %v2538
    %2609 = vst.msk [vmem:[%s2 + $0x1e8] sm:$0xff] %vm517, %v2540
    %2610 = vst [vmem:[%s2 + $0x1f0] sm:$0xff] %v2544
    %2611 = vst.msk [vmem:[%s2 + $0x1f8] sm:$0xff] %vm517, %v2546
    // Predicated region
    $region14: #{generator_forward.1} parent=1 // pred_check
      _
    $region15: #{generator_forward.1} parent=1 // pred_check_branch
      %2613 = sbr.rel (0) target = $region17
    $region16: #{generator_forward.1} parent=1 // pred_region
      _
    $region17: #{generator_forward.1} parent=1 // pred_fallthru
      _
    // Predicated region
    $region18: #{generator_forward.1} parent=1 // pred_check
      _
    $region19: #{generator_forward.1} parent=1 // pred_check_branch
      %2615 = sbr.rel (0) target = $region21
    $region20: #{generator_forward.1} parent=1 // pred_region
      _
    $region21: #{generator_forward.1} parent=1 // pred_fallthru
      _
    %2616 = vsyncpa [#allocation3], 1

</llo_original>
